<compile_context>
chip_gen: v5e
topology: v5e:2x2
jax: 0.10.0
libtpu: 0.0.40
codegen_flags: <defaults>
</compile_context>

<pallas_src>
import jax
import jax.numpy as jnp
from jax import lax
from jax.experimental import pallas as pl
from jax.experimental.pallas import tpu as pltpu

# MXU operand dtype: bf16 operands + f32 accumulation + f32 elementwise math.
# Set to jnp.float32 for bit-closer f32 numerics (then tighten tolerances).
_MXU_DTYPE = jnp.bfloat16


# ------------------------------ fused kernel ---------------------------------
def _make_fused_lstm_kernel(num_layers, T, B, I, H):
    """Builds the fused (LSTM stack + FC) kernel for a fixed config."""

    def kernel(*refs):
        x_ref = refs[0]                                 # (T*B, I)  time-major rows
        layer_refs = refs[1:1 + 3 * num_layers]         # per layer: WihT, WhhT, bias
        wfc_ref = refs[1 + 3 * num_layers]              # (1, H)   f32
        bfc_ref = refs[2 + 3 * num_layers]              # (1, 1)   f32
        out_ref = refs[3 + 3 * num_layers]              # (B, 1)   f32
        xproj_ref, seq_ref, h_ref, c_ref = refs[4 + 3 * num_layers:]

        for layer in range(num_layers):
            wih_ref = layer_refs[3 * layer + 0]         # (in_dim, 4H) bf16
            whh_ref = layer_refs[3 * layer + 1]         # (H, 4H)      bf16
            b_ref = layer_refs[3 * layer + 2]           # (1, 4H)      f32 (b_ih+b_hh)

            # ---- batched input projection for ALL timesteps: one MXU matmul,
            #      bias folded in once here (not per step).
            if layer == 0:
                x2d = x_ref[...]                        # (T*B, I)
            else:
                x2d = seq_ref[...]                      # (T*B, H) previous layer out
            proj = jnp.dot(x2d.astype(_MXU_DTYPE), wih_ref[...],
                           preferred_element_type=jnp.float32)     # (T*B, 4H) f32
            xproj_ref[...] = proj + b_ref[...]

            # ---- recurrence: h/c in VMEM scratch, explicitly re-zeroed per layer.
            h_ref[...] = jnp.zeros_like(h_ref)
            c_ref[...] = jnp.zeros_like(c_ref)
            whh = whh_ref[...]                          # loop-invariant weight load
            last_layer = layer == num_layers - 1

            def step(t, carry, whh=whh, last_layer=last_layer):
                row = t * B
                h_prev = h_ref[...]                                        # (B, H)
                gates = xproj_ref[pl.ds(row, B), :] + jnp.dot(
                    h_prev.astype(_MXU_DTYPE), whh,
                    preferred_element_type=jnp.float32)                    # (B, 4H)
                i_g = jax.nn.sigmoid(gates[:, 0 * H:1 * H])
                f_g = jax.nn.sigmoid(gates[:, 1 * H:2 * H])
                g_g = jnp.tanh(gates[:, 2 * H:3 * H])
                o_g = jax.nn.sigmoid(gates[:, 3 * H:4 * H])
                c_new = f_g * c_ref[...] + i_g * g_g
                h_new = o_g * jnp.tanh(c_new)
                c_ref[...] = c_new
                h_ref[...] = h_new
                if not last_layer:                      # feed next layer (VMEM only)
                    seq_ref[pl.ds(row, B), :] = h_new
                return carry

            lax.fori_loop(0, T, step, 0, unroll=True)

        # ---- FC head fused as epilogue: (B,H) * (1,H) -> lane-reduce -> (B,1).
        h_last = h_ref[...]
        out_ref[...] = (jnp.sum(h_last * wfc_ref[...], axis=-1, keepdims=True)
                        + bfc_ref[...]).astype(out_ref.dtype)

    return kernel


# --------------------------------- forward ------------------------------------
@jax.jit
def lstm_forward(x, lstm_params, fc_params):
    """Equivalent of the PyTorch LSTM module forward. x: (B, T, I) -> (B, 1)."""
    B, T, I = x.shape
    H = lstm_params[0][1].shape[-1]
    num_layers = len(lstm_params)

    # Time-major rows packed as row = t*B + b (so per-step slices are contiguous).
    xs2d = jnp.transpose(x.astype(jnp.float32), (1, 0, 2)).reshape(T * B, I)

    args = [xs2d]
    for (wih, whh, bih, bhh) in lstm_params:
        args.append(wih.T.astype(_MXU_DTYPE))                       # (in, 4H)
        args.append(whh.T.astype(_MXU_DTYPE))                       # (H, 4H)
        args.append((bih + bhh).reshape(1, -1).astype(jnp.float32)) # (1, 4H)
    wfc, bfc = fc_params
    args.append(wfc.astype(jnp.float32))                            # (1, H)
    args.append(bfc.reshape(1, 1).astype(jnp.float32))              # (1, 1)

    vmem = pl.BlockSpec(memory_space=pltpu.MemorySpace.VMEM)
    # NOTE: total VMEM footprint here is < 1 MiB; when H scales up, tile the 4H
    # gate axis / keep weights bf16 so the resident set fits v7x's 64 MiB.
    return pl.pallas_call(
        _make_fused_lstm_kernel(num_layers, T, B, I, H),
        out_shape=jax.ShapeDtypeStruct((B, 1), jnp.float32),
        in_specs=[vmem] * len(args),
        out_specs=vmem,
        scratch_shapes=[
            pltpu.VMEM((T * B, 4 * H), jnp.float32),   # per-layer input projection
            pltpu.VMEM((T * B, H), jnp.float32),       # inter-layer hidden sequence
            pltpu.VMEM((B, H), jnp.float32),           # h carry
            pltpu.VMEM((B, H), jnp.float32),           # c carry
        ],
    )(*args)


# ------------------------------ parameter init --------------------------------
def init_params(key, input_size, hidden_size, num_layers):
    """Deterministic uniform(-1/sqrt(H), 1/sqrt(H)) init (matches torch's scheme)."""
    k = 1.0 / float(hidden_size) ** 0.5
    lstm_params = []
    for layer in range(num_layers):
        in_dim = input_size if layer == 0 else hidden_size
        key, k1, k2, k3, k4 = jax.random.split(key, 5)
        wih = jax.random.uniform(k1, (4 * hidden_size, in_dim), jnp.float32, -k, k)
        whh = jax.random.uniform(k2, (4 * hidden_size, hidden_size), jnp.float32, -k, k)
        bih = jax.random.uniform(k3, (4 * hidden_size,), jnp.float32, -k, k)
        bhh = jax.random.uniform(k4, (4 * hidden_size,), jnp.float32, -k, k)
        lstm_params.append((wih, whh, bih, bhh))
    key, k5, k6 = jax.random.split(key, 3)
    wfc = jax.random.uniform(k5, (1, hidden_size), jnp.float32, -k, k)
    bfc = jax.random.uniform(k6, (1,), jnp.float32, -k, k)
    return lstm_params, (wfc, bfc)


# --------------------------- pure-JAX reference --------------------------------
def lstm_reference(x, lstm_params, fc_params):
    B, T, _ = x.shape
    H = lstm_params[0][1].shape[-1]
    xs = x
    for (wih, whh, bih, bhh) in lstm_params:
        h = jnp.zeros((B, H), jnp.float32)
        c = jnp.zeros((B, H), jnp.float32)
        outs = []
        for t in range(T):
            gates = xs[:, t, :] @ wih.T + h @ whh.T + bih + bhh
            i = jax.nn.sigmoid(gates[:, :H])
            f = jax.nn.sigmoid(gates[:, H:2 * H])
            g = jnp.tanh(gates[:, 2 * H:3 * H])
            o = jax.nn.sigmoid(gates[:, 3 * H:])
            c = f * c + i * g
            h = o * jnp.tanh(c)
            outs.append(h)
        xs = jnp.stack(outs, axis=1)
    wfc, bfc = fc_params
    return xs[:, -1, :] @ wfc.T + bfc


if __name__ == "__main__":
    B, T, INPUT_SIZE, HIDDEN, LAYERS = 2, 8, 4, 32, 2

    key = jax.random.PRNGKey(0)
    key, xkey = jax.random.split(key)
    x = jax.random.normal(xkey, (B, T, INPUT_SIZE), jnp.float32)

    lstm_params, fc_params = init_params(key, INPUT_SIZE, HIDDEN, LAYERS)

    out = lstm_forward(x, lstm_params, fc_params)
    out = jax.block_until_ready(out)

    ref = lstm_reference(x, lstm_params, fc_params)
    assert out.shape == (B, 1), out.shape
    # bf16 MXU operands (f32 accumulation / elementwise) -> widened tolerance.
    assert jnp.allclose(out, ref, atol=3e-2, rtol=3e-2), (out, ref)

    print("KERNEL_OK")
</pallas_src>

<mosaic_0001>
module attributes {stable_mosaic.version = 11 : i64} {
  func.func @kernel(%arg0: memref<16x4xf32, #tpu.memory_space<vmem>>, %arg1: memref<4x128xbf16, #tpu.memory_space<vmem>>, %arg2: memref<32x128xbf16, #tpu.memory_space<vmem>>, %arg3: memref<1x128xf32, #tpu.memory_space<vmem>>, %arg4: memref<32x128xbf16, #tpu.memory_space<vmem>>, %arg5: memref<32x128xbf16, #tpu.memory_space<vmem>>, %arg6: memref<1x128xf32, #tpu.memory_space<vmem>>, %arg7: memref<1x32xf32, #tpu.memory_space<vmem>>, %arg8: memref<1x1xf32, #tpu.memory_space<vmem>>, %arg9: memref<2x1xf32, #tpu.memory_space<vmem>>, %arg10: memref<16x128xf32, #tpu.memory_space<vmem>>, %arg11: memref<16x32xf32, #tpu.memory_space<vmem>>, %arg12: memref<2x32xf32, #tpu.memory_space<vmem>>, %arg13: memref<2x32xf32, #tpu.memory_space<vmem>>) attributes {dimension_semantics = [], scalar_prefetch = 0 : i64, scratch_operands = 4 : i64, tpu.core_type = #tpu.core_type<tc>} {
    %c0 = arith.constant 0 : index
    %c0_0 = arith.constant 0 : index
    %0 = vector.load %arg0[%c0, %c0_0] : memref<16x4xf32, #tpu.memory_space<vmem>>, vector<16x4xf32>
    %1 = arith.truncf %0 : vector<16x4xf32> to vector<16x4xbf16>
    %c0_1 = arith.constant 0 : index
    %c0_2 = arith.constant 0 : index
    %2 = vector.load %arg1[%c0_1, %c0_2] : memref<4x128xbf16, #tpu.memory_space<vmem>>, vector<4x128xbf16>
    %cst = arith.constant dense<0.000000e+00> : vector<16x128xf32>
    %3 = tpu.matmul %1, %2, %cst {dimension_numbers = #tpu.dot_dimension_numbers<[1], [0], [0], [1], [0, 0, 1, 1], [], []>} : vector<16x4xbf16>, vector<4x128xbf16>, vector<16x128xf32> -> vector<16x128xf32>
    %c0_3 = arith.constant 0 : index
    %c0_4 = arith.constant 0 : index
    %4 = vector.load %arg3[%c0_3, %c0_4] : memref<1x128xf32, #tpu.memory_space<vmem>>, vector<1x128xf32>
    %5 = vector.broadcast %4 : vector<1x128xf32> to vector<16x128xf32>
    %6 = arith.addf %3, %5 : vector<16x128xf32>
    %c0_5 = arith.constant 0 : index
    %c0_6 = arith.constant 0 : index
    %7 = vector.load %arg10[%c0_5, %c0_6] : memref<16x128xf32, #tpu.memory_space<vmem>>, vector<16x128xf32>
    tpu.vector_store %arg10[%c0_5, %c0_6], %6 {strides = array<i32>} : memref<16x128xf32, #tpu.memory_space<vmem>>, vector<16x128xf32>,
    %cst_7 = arith.constant 0.000000e+00 : f32
    %8 = vector.broadcast %cst_7 : f32 to vector<2x32xf32>
    %c0_8 = arith.constant 0 : index
    %c0_9 = arith.constant 0 : index
    %9 = vector.load %arg12[%c0_8, %c0_9] : memref<2x32xf32, #tpu.memory_space<vmem>>, vector<2x32xf32>
    tpu.vector_store %arg12[%c0_8, %c0_9], %8 {strides = array<i32>} : memref<2x32xf32, #tpu.memory_space<vmem>>, vector<2x32xf32>,
    %cst_10 = arith.constant 0.000000e+00 : f32
    %10 = vector.broadcast %cst_10 : f32 to vector<2x32xf32>
    %c0_11 = arith.constant 0 : index
    %c0_12 = arith.constant 0 : index
    %11 = vector.load %arg13[%c0_11, %c0_12] : memref<2x32xf32, #tpu.memory_space<vmem>>, vector<2x32xf32>
    tpu.vector_store %arg13[%c0_11, %c0_12], %10 {strides = array<i32>} : memref<2x32xf32, #tpu.memory_space<vmem>>, vector<2x32xf32>,
    %c0_13 = arith.constant 0 : index
    %c0_14 = arith.constant 0 : index
    %12 = vector.load %arg2[%c0_13, %c0_14] : memref<32x128xbf16, #tpu.memory_space<vmem>>, vector<32x128xbf16>
    %c0_i32 = arith.constant 0 : i32
    %c2_i32 = arith.constant 2 : i32
    %13 = arith.muli %c0_i32, %c2_i32 : i32
    %c0_15 = arith.constant 0 : index
    %c0_16 = arith.constant 0 : index
    %14 = vector.load %arg12[%c0_15, %c0_16] : memref<2x32xf32, #tpu.memory_space<vmem>>, vector<2x32xf32>
    %15 = arith.index_cast %13 : i32 to index
    %c0_17 = arith.constant 0 : index
    %16 = vector.load %arg10[%15, %c0_17] : memref<16x128xf32, #tpu.memory_space<vmem>>, vector<2x128xf32>
    %17 = arith.truncf %14 : vector<2x32xf32> to vector<2x32xbf16>
    %cst_18 = arith.constant dense<0.000000e+00> : vector<2x128xf32>
    %18 = tpu.matmul %17, %12, %cst_18 {dimension_numbers = #tpu.dot_dimension_numbers<[1], [0], [0], [1], [0, 0, 1, 1], [], []>} : vector<2x32xbf16>, vector<32x128xbf16>, vector<2x128xf32> -> vector<2x128xf32>
    %19 = arith.addf %16, %18 : vector<2x128xf32>
    %20 = vector.extract_strided_slice %19 {offsets = [0, 0], sizes = [2, 32], strides = [1, 1]} : vector<2x128xf32> to vector<2x32xf32>
    %21 = arith.negf %20 : vector<2x32xf32>
    %22 = math.exp %21 : vector<2x32xf32>
    %cst_19 = arith.constant 1.000000e+00 : f32
    %23 = vector.broadcast %cst_19 : f32 to vector<2x32xf32>
    %24 = arith.addf %23, %22 : vector<2x32xf32>
    %25 = arith.divf %23, %24 : vector<2x32xf32>
    %26 = vector.extract_strided_slice %19 {offsets = [0, 32], sizes = [2, 32], strides = [1, 1]} : vector<2x128xf32> to vector<2x32xf32>
    %27 = arith.negf %26 : vector<2x32xf32>
    %28 = math.exp %27 : vector<2x32xf32>
    %cst_20 = arith.constant 1.000000e+00 : f32
    %29 = vector.broadcast %cst_20 : f32 to vector<2x32xf32>
    %30 = arith.addf %29, %28 : vector<2x32xf32>
    %31 = arith.divf %29, %30 : vector<2x32xf32>
    %32 = vector.extract_strided_slice %19 {offsets = [0, 64], sizes = [2, 32], strides = [1, 1]} : vector<2x128xf32> to vector<2x32xf32>
    %33 = math.tanh %32 : vector<2x32xf32>
    %34 = vector.extract_strided_slice %19 {offsets = [0, 96], sizes = [2, 32], strides = [1, 1]} : vector<2x128xf32> to vector<2x32xf32>
    %35 = arith.negf %34 : vector<2x32xf32>
    %36 = math.exp %35 : vector<2x32xf32>
    %cst_21 = arith.constant 1.000000e+00 : f32
    %37 = vector.broadcast %cst_21 : f32 to vector<2x32xf32>
    %38 = arith.addf %37, %36 : vector<2x32xf32>
    %39 = arith.divf %37, %38 : vector<2x32xf32>
    %c0_22 = arith.constant 0 : index
    %c0_23 = arith.constant 0 : index
    %40 = vector.load %arg13[%c0_22, %c0_23] : memref<2x32xf32, #tpu.memory_space<vmem>>, vector<2x32xf32>
    %41 = arith.mulf %31, %40 : vector<2x32xf32>
    %42 = arith.mulf %25, %33 : vector<2x32xf32>
    %43 = arith.addf %41, %42 : vector<2x32xf32>
    %44 = math.tanh %43 : vector<2x32xf32>
    %45 = arith.mulf %39, %44 : vector<2x32xf32>
    %c0_24 = arith.constant 0 : index
    %c0_25 = arith.constant 0 : index
    %46 = vector.load %arg13[%c0_24, %c0_25] : memref<2x32xf32, #tpu.memory_space<vmem>>, vector<2x32xf32>
    tpu.vector_store %arg13[%c0_24, %c0_25], %43 {strides = array<i32>} : memref<2x32xf32, #tpu.memory_space<vmem>>, vector<2x32xf32>,
    %c0_26 = arith.constant 0 : index
    %c0_27 = arith.constant 0 : index
    %47 = vector.load %arg12[%c0_26, %c0_27] : memref<2x32xf32, #tpu.memory_space<vmem>>, vector<2x32xf32>
    tpu.vector_store %arg12[%c0_26, %c0_27], %45 {strides = array<i32>} : memref<2x32xf32, #tpu.memory_space<vmem>>, vector<2x32xf32>,
    %48 = arith.index_cast %13 : i32 to index
    %c0_28 = arith.constant 0 : index
    %49 = vector.load %arg11[%48, %c0_28] : memref<16x32xf32, #tpu.memory_space<vmem>>, vector<2x32xf32>
    tpu.vector_store %arg11[%48, %c0_28], %45 {strides = array<i32>} : memref<16x32xf32, #tpu.memory_space<vmem>>, vector<2x32xf32>,
    %c1_i32 = arith.constant 1 : i32
    %c2_i32_29 = arith.constant 2 : i32
    %50 = arith.muli %c1_i32, %c2_i32_29 : i32
    %c0_30 = arith.constant 0 : index
    %c0_31 = arith.constant 0 : index
    %51 = vector.load %arg12[%c0_30, %c0_31] : memref<2x32xf32, #tpu.memory_space<vmem>>, vector<2x32xf32>
    %52 = arith.index_cast %50 : i32 to index
    %c0_32 = arith.constant 0 : index
    %53 = vector.load %arg10[%52, %c0_32] : memref<16x128xf32, #tpu.memory_space<vmem>>, vector<2x128xf32>
    %54 = arith.truncf %51 : vector<2x32xf32> to vector<2x32xbf16>
    %cst_33 = arith.constant dense<0.000000e+00> : vector<2x128xf32>
    %55 = tpu.matmul %54, %12, %cst_33 {dimension_numbers = #tpu.dot_dimension_numbers<[1], [0], [0], [1], [0, 0, 1, 1], [], []>} : vector<2x32xbf16>, vector<32x128xbf16>, vector<2x128xf32> -> vector<2x128xf32>
    %56 = arith.addf %53, %55 : vector<2x128xf32>
    %57 = vector.extract_strided_slice %56 {offsets = [0, 0], sizes = [2, 32], strides = [1, 1]} : vector<2x128xf32> to vector<2x32xf32>
    %58 = arith.negf %57 : vector<2x32xf32>
    %59 = math.exp %58 : vector<2x32xf32>
    %cst_34 = arith.constant 1.000000e+00 : f32
    %60 = vector.broadcast %cst_34 : f32 to vector<2x32xf32>
    %61 = arith.addf %60, %59 : vector<2x32xf32>
    %62 = arith.divf %60, %61 : vector<2x32xf32>
    %63 = vector.extract_strided_slice %56 {offsets = [0, 32], sizes = [2, 32], strides = [1, 1]} : vector<2x128xf32> to vector<2x32xf32>
    %64 = arith.negf %63 : vector<2x32xf32>
    %65 = math.exp %64 : vector<2x32xf32>
    %cst_35 = arith.constant 1.000000e+00 : f32
    %66 = vector.broadcast %cst_35 : f32 to vector<2x32xf32>
    %67 = arith.addf %66, %65 : vector<2x32xf32>
    %68 = arith.divf %66, %67 : vector<2x32xf32>
    %69 = vector.extract_strided_slice %56 {offsets = [0, 64], sizes = [2, 32], strides = [1, 1]} : vector<2x128xf32> to vector<2x32xf32>
    %70 = math.tanh %69 : vector<2x32xf32>
    %71 = vector.extract_strided_slice %56 {offsets = [0, 96], sizes = [2, 32], strides = [1, 1]} : vector<2x128xf32> to vector<2x32xf32>
    %72 = arith.negf %71 : vector<2x32xf32>
    %73 = math.exp %72 : vector<2x32xf32>
    %cst_36 = arith.constant 1.000000e+00 : f32
    %74 = vector.broadcast %cst_36 : f32 to vector<2x32xf32>
    %75 = arith.addf %74, %73 : vector<2x32xf32>
    %76 = arith.divf %74, %75 : vector<2x32xf32>
    %c0_37 = arith.constant 0 : index
    %c0_38 = arith.constant 0 : index
    %77 = vector.load %arg13[%c0_37, %c0_38] : memref<2x32xf32, #tpu.memory_space<vmem>>, vector<2x32xf32>
    %78 = arith.mulf %68, %77 : vector<2x32xf32>
    %79 = arith.mulf %62, %70 : vector<2x32xf32>
    %80 = arith.addf %78, %79 : vector<2x32xf32>
    %81 = math.tanh %80 : vector<2x32xf32>
    %82 = arith.mulf %76, %81 : vector<2x32xf32>
    %c0_39 = arith.constant 0 : index
    %c0_40 = arith.constant 0 : index
    %83 = vector.load %arg13[%c0_39, %c0_40] : memref<2x32xf32, #tpu.memory_space<vmem>>, vector<2x32xf32>
    tpu.vector_store %arg13[%c0_39, %c0_40], %80 {strides = array<i32>} : memref<2x32xf32, #tpu.memory_space<vmem>>, vector<2x32xf32>,
    %c0_41 = arith.constant 0 : index
    %c0_42 = arith.constant 0 : index
    %84 = vector.load %arg12[%c0_41, %c0_42] : memref<2x32xf32, #tpu.memory_space<vmem>>, vector<2x32xf32>
    tpu.vector_store %arg12[%c0_41, %c0_42], %82 {strides = array<i32>} : memref<2x32xf32, #tpu.memory_space<vmem>>, vector<2x32xf32>,
    %85 = arith.index_cast %50 : i32 to index
    %c0_43 = arith.constant 0 : index
    %86 = vector.load %arg11[%85, %c0_43] : memref<16x32xf32, #tpu.memory_space<vmem>>, vector<2x32xf32>
    tpu.vector_store %arg11[%85, %c0_43], %82 {strides = array<i32>} : memref<16x32xf32, #tpu.memory_space<vmem>>, vector<2x32xf32>,
    %c2_i32_44 = arith.constant 2 : i32
    %c2_i32_45 = arith.constant 2 : i32
    %87 = arith.muli %c2_i32_44, %c2_i32_45 : i32
    %c0_46 = arith.constant 0 : index
    %c0_47 = arith.constant 0 : index
    %88 = vector.load %arg12[%c0_46, %c0_47] : memref<2x32xf32, #tpu.memory_space<vmem>>, vector<2x32xf32>
    %89 = arith.index_cast %87 : i32 to index
    %c0_48 = arith.constant 0 : index
    %90 = vector.load %arg10[%89, %c0_48] : memref<16x128xf32, #tpu.memory_space<vmem>>, vector<2x128xf32>
    %91 = arith.truncf %88 : vector<2x32xf32> to vector<2x32xbf16>
    %cst_49 = arith.constant dense<0.000000e+00> : vector<2x128xf32>
    %92 = tpu.matmul %91, %12, %cst_49 {dimension_numbers = #tpu.dot_dimension_numbers<[1], [0], [0], [1], [0, 0, 1, 1], [], []>} : vector<2x32xbf16>, vector<32x128xbf16>, vector<2x128xf32> -> vector<2x128xf32>
    %93 = arith.addf %90, %92 : vector<2x128xf32>
    %94 = vector.extract_strided_slice %93 {offsets = [0, 0], sizes = [2, 32], strides = [1, 1]} : vector<2x128xf32> to vector<2x32xf32>
    %95 = arith.negf %94 : vector<2x32xf32>
    %96 = math.exp %95 : vector<2x32xf32>
    %cst_50 = arith.constant 1.000000e+00 : f32
    %97 = vector.broadcast %cst_50 : f32 to vector<2x32xf32>
    %98 = arith.addf %97, %96 : vector<2x32xf32>
    %99 = arith.divf %97, %98 : vector<2x32xf32>
    %100 = vector.extract_strided_slice %93 {offsets = [0, 32], sizes = [2, 32], strides = [1, 1]} : vector<2x128xf32> to vector<2x32xf32>
    %101 = arith.negf %100 : vector<2x32xf32>
    %102 = math.exp %101 : vector<2x32xf32>
    %cst_51 = arith.constant 1.000000e+00 : f32
    %103 = vector.broadcast %cst_51 : f32 to vector<2x32xf32>
    %104 = arith.addf %103, %102 : vector<2x32xf32>
    %105 = arith.divf %103, %104 : vector<2x32xf32>
    %106 = vector.extract_strided_slice %93 {offsets = [0, 64], sizes = [2, 32], strides = [1, 1]} : vector<2x128xf32> to vector<2x32xf32>
    %107 = math.tanh %106 : vector<2x32xf32>
    %108 = vector.extract_strided_slice %93 {offsets = [0, 96], sizes = [2, 32], strides = [1, 1]} : vector<2x128xf32> to vector<2x32xf32>
    %109 = arith.negf %108 : vector<2x32xf32>
    %110 = math.exp %109 : vector<2x32xf32>
    %cst_52 = arith.constant 1.000000e+00 : f32
    %111 = vector.broadcast %cst_52 : f32 to vector<2x32xf32>
    %112 = arith.addf %111, %110 : vector<2x32xf32>
    %113 = arith.divf %111, %112 : vector<2x32xf32>
    %c0_53 = arith.constant 0 : index
    %c0_54 = arith.constant 0 : index
    %114 = vector.load %arg13[%c0_53, %c0_54] : memref<2x32xf32, #tpu.memory_space<vmem>>, vector<2x32xf32>
    %115 = arith.mulf %105, %114 : vector<2x32xf32>
    %116 = arith.mulf %99, %107 : vector<2x32xf32>
    %117 = arith.addf %115, %116 : vector<2x32xf32>
    %118 = math.tanh %117 : vector<2x32xf32>
    %119 = arith.mulf %113, %118 : vector<2x32xf32>
    %c0_55 = arith.constant 0 : index
    %c0_56 = arith.constant 0 : index
    %120 = vector.load %arg13[%c0_55, %c0_56] : memref<2x32xf32, #tpu.memory_space<vmem>>, vector<2x32xf32>
    tpu.vector_store %arg13[%c0_55, %c0_56], %117 {strides = array<i32>} : memref<2x32xf32, #tpu.memory_space<vmem>>, vector<2x32xf32>,
    %c0_57 = arith.constant 0 : index
    %c0_58 = arith.constant 0 : index
    %121 = vector.load %arg12[%c0_57, %c0_58] : memref<2x32xf32, #tpu.memory_space<vmem>>, vector<2x32xf32>
    tpu.vector_store %arg12[%c0_57, %c0_58], %119 {strides = array<i32>} : memref<2x32xf32, #tpu.memory_space<vmem>>, vector<2x32xf32>,
    %122 = arith.index_cast %87 : i32 to index
    %c0_59 = arith.constant 0 : index
    %123 = vector.load %arg11[%122, %c0_59] : memref<16x32xf32, #tpu.memory_space<vmem>>, vector<2x32xf32>
    tpu.vector_store %arg11[%122, %c0_59], %119 {strides = array<i32>} : memref<16x32xf32, #tpu.memory_space<vmem>>, vector<2x32xf32>,
    %c3_i32 = arith.constant 3 : i32
    %c2_i32_60 = arith.constant 2 : i32
    %124 = arith.muli %c3_i32, %c2_i32_60 : i32
    %c0_61 = arith.constant 0 : index
    %c0_62 = arith.constant 0 : index
    %125 = vector.load %arg12[%c0_61, %c0_62] : memref<2x32xf32, #tpu.memory_space<vmem>>, vector<2x32xf32>
    %126 = arith.index_cast %124 : i32 to index
    %c0_63 = arith.constant 0 : index
    %127 = vector.load %arg10[%126, %c0_63] : memref<16x128xf32, #tpu.memory_space<vmem>>, vector<2x128xf32>
    %128 = arith.truncf %125 : vector<2x32xf32> to vector<2x32xbf16>
    %cst_64 = arith.constant dense<0.000000e+00> : vector<2x128xf32>
    %129 = tpu.matmul %128, %12, %cst_64 {dimension_numbers = #tpu.dot_dimension_numbers<[1], [0], [0], [1], [0, 0, 1, 1], [], []>} : vector<2x32xbf16>, vector<32x128xbf16>, vector<2x128xf32> -> vector<2x128xf32>
    %130 = arith.addf %127, %129 : vector<2x128xf32>
    %131 = vector.extract_strided_slice %130 {offsets = [0, 0], sizes = [2, 32], strides = [1, 1]} : vector<2x128xf32> to vector<2x32xf32>
    %132 = arith.negf %131 : vector<2x32xf32>
    %133 = math.exp %132 : vector<2x32xf32>
    %cst_65 = arith.constant 1.000000e+00 : f32
    %134 = vector.broadcast %cst_65 : f32 to vector<2x32xf32>
    %135 = arith.addf %134, %133 : vector<2x32xf32>
    %136 = arith.divf %134, %135 : vector<2x32xf32>
    %137 = vector.extract_strided_slice %130 {offsets = [0, 32], sizes = [2, 32], strides = [1, 1]} : vector<2x128xf32> to vector<2x32xf32>
    %138 = arith.negf %137 : vector<2x32xf32>
    %139 = math.exp %138 : vector<2x32xf32>
    %cst_66 = arith.constant 1.000000e+00 : f32
    %140 = vector.broadcast %cst_66 : f32 to vector<2x32xf32>
    %141 = arith.addf %140, %139 : vector<2x32xf32>
    %142 = arith.divf %140, %141 : vector<2x32xf32>
    %143 = vector.extract_strided_slice %130 {offsets = [0, 64], sizes = [2, 32], strides = [1, 1]} : vector<2x128xf32> to vector<2x32xf32>
    %144 = math.tanh %143 : vector<2x32xf32>
    %145 = vector.extract_strided_slice %130 {offsets = [0, 96], sizes = [2, 32], strides = [1, 1]} : vector<2x128xf32> to vector<2x32xf32>
    %146 = arith.negf %145 : vector<2x32xf32>
    %147 = math.exp %146 : vector<2x32xf32>
    %cst_67 = arith.constant 1.000000e+00 : f32
    %148 = vector.broadcast %cst_67 : f32 to vector<2x32xf32>
    %149 = arith.addf %148, %147 : vector<2x32xf32>
    %150 = arith.divf %148, %149 : vector<2x32xf32>
    %c0_68 = arith.constant 0 : index
    %c0_69 = arith.constant 0 : index
    %151 = vector.load %arg13[%c0_68, %c0_69] : memref<2x32xf32, #tpu.memory_space<vmem>>, vector<2x32xf32>
    %152 = arith.mulf %142, %151 : vector<2x32xf32>
    %153 = arith.mulf %136, %144 : vector<2x32xf32>
    %154 = arith.addf %152, %153 : vector<2x32xf32>
    %155 = math.tanh %154 : vector<2x32xf32>
    %156 = arith.mulf %150, %155 : vector<2x32xf32>
    %c0_70 = arith.constant 0 : index
    %c0_71 = arith.constant 0 : index
    %157 = vector.load %arg13[%c0_70, %c0_71] : memref<2x32xf32, #tpu.memory_space<vmem>>, vector<2x32xf32>
    tpu.vector_store %arg13[%c0_70, %c0_71], %154 {strides = array<i32>} : memref<2x32xf32, #tpu.memory_space<vmem>>, vector<2x32xf32>,
    %c0_72 = arith.constant 0 : index
    %c0_73 = arith.constant 0 : index
    %158 = vector.load %arg12[%c0_72, %c0_73] : memref<2x32xf32, #tpu.memory_space<vmem>>, vector<2x32xf32>
    tpu.vector_store %arg12[%c0_72, %c0_73], %156 {strides = array<i32>} : memref<2x32xf32, #tpu.memory_space<vmem>>, vector<2x32xf32>,
    %159 = arith.index_cast %124 : i32 to index
    %c0_74 = arith.constant 0 : index
    %160 = vector.load %arg11[%159, %c0_74] : memref<16x32xf32, #tpu.memory_space<vmem>>, vector<2x32xf32>
    tpu.vector_store %arg11[%159, %c0_74], %156 {strides = array<i32>} : memref<16x32xf32, #tpu.memory_space<vmem>>, vector<2x32xf32>,
    %c4_i32 = arith.constant 4 : i32
    %c2_i32_75 = arith.constant 2 : i32
    %161 = arith.muli %c4_i32, %c2_i32_75 : i32
    %c0_76 = arith.constant 0 : index
    %c0_77 = arith.constant 0 : index
    %162 = vector.load %arg12[%c0_76, %c0_77] : memref<2x32xf32, #tpu.memory_space<vmem>>, vector<2x32xf32>
    %163 = arith.index_cast %161 : i32 to index
    %c0_78 = arith.constant 0 : index
    %164 = vector.load %arg10[%163, %c0_78] : memref<16x128xf32, #tpu.memory_space<vmem>>, vector<2x128xf32>
    %165 = arith.truncf %162 : vector<2x32xf32> to vector<2x32xbf16>
    %cst_79 = arith.constant dense<0.000000e+00> : vector<2x128xf32>
    %166 = tpu.matmul %165, %12, %cst_79 {dimension_numbers = #tpu.dot_dimension_numbers<[1], [0], [0], [1], [0, 0, 1, 1], [], []>} : vector<2x32xbf16>, vector<32x128xbf16>, vector<2x128xf32> -> vector<2x128xf32>
    %167 = arith.addf %164, %166 : vector<2x128xf32>
    %168 = vector.extract_strided_slice %167 {offsets = [0, 0], sizes = [2, 32], strides = [1, 1]} : vector<2x128xf32> to vector<2x32xf32>
    %169 = arith.negf %168 : vector<2x32xf32>
    %170 = math.exp %169 : vector<2x32xf32>
    %cst_80 = arith.constant 1.000000e+00 : f32
    %171 = vector.broadcast %cst_80 : f32 to vector<2x32xf32>
    %172 = arith.addf %171, %170 : vector<2x32xf32>
    %173 = arith.divf %171, %172 : vector<2x32xf32>
    %174 = vector.extract_strided_slice %167 {offsets = [0, 32], sizes = [2, 32], strides = [1, 1]} : vector<2x128xf32> to vector<2x32xf32>
    %175 = arith.negf %174 : vector<2x32xf32>
    %176 = math.exp %175 : vector<2x32xf32>
    %cst_81 = arith.constant 1.000000e+00 : f32
    %177 = vector.broadcast %cst_81 : f32 to vector<2x32xf32>
    %178 = arith.addf %177, %176 : vector<2x32xf32>
    %179 = arith.divf %177, %178 : vector<2x32xf32>
    %180 = vector.extract_strided_slice %167 {offsets = [0, 64], sizes = [2, 32], strides = [1, 1]} : vector<2x128xf32> to vector<2x32xf32>
    %181 = math.tanh %180 : vector<2x32xf32>
    %182 = vector.extract_strided_slice %167 {offsets = [0, 96], sizes = [2, 32], strides = [1, 1]} : vector<2x128xf32> to vector<2x32xf32>
    %183 = arith.negf %182 : vector<2x32xf32>
    %184 = math.exp %183 : vector<2x32xf32>
    %cst_82 = arith.constant 1.000000e+00 : f32
    %185 = vector.broadcast %cst_82 : f32 to vector<2x32xf32>
    %186 = arith.addf %185, %184 : vector<2x32xf32>
    %187 = arith.divf %185, %186 : vector<2x32xf32>
    %c0_83 = arith.constant 0 : index
    %c0_84 = arith.constant 0 : index
    %188 = vector.load %arg13[%c0_83, %c0_84] : memref<2x32xf32, #tpu.memory_space<vmem>>, vector<2x32xf32>
    %189 = arith.mulf %179, %188 : vector<2x32xf32>
    %190 = arith.mulf %173, %181 : vector<2x32xf32>
    %191 = arith.addf %189, %190 : vector<2x32xf32>
    %192 = math.tanh %191 : vector<2x32xf32>
    %193 = arith.mulf %187, %192 : vector<2x32xf32>
    %c0_85 = arith.constant 0 : index
    %c0_86 = arith.constant 0 : index
    %194 = vector.load %arg13[%c0_85, %c0_86] : memref<2x32xf32, #tpu.memory_space<vmem>>, vector<2x32xf32>
    tpu.vector_store %arg13[%c0_85, %c0_86], %191 {strides = array<i32>} : memref<2x32xf32, #tpu.memory_space<vmem>>, vector<2x32xf32>,
    %c0_87 = arith.constant 0 : index
    %c0_88 = arith.constant 0 : index
    %195 = vector.load %arg12[%c0_87, %c0_88] : memref<2x32xf32, #tpu.memory_space<vmem>>, vector<2x32xf32>
    tpu.vector_store %arg12[%c0_87, %c0_88], %193 {strides = array<i32>} : memref<2x32xf32, #tpu.memory_space<vmem>>, vector<2x32xf32>,
    %196 = arith.index_cast %161 : i32 to index
    %c0_89 = arith.constant 0 : index
    %197 = vector.load %arg11[%196, %c0_89] : memref<16x32xf32, #tpu.memory_space<vmem>>, vector<2x32xf32>
    tpu.vector_store %arg11[%196, %c0_89], %193 {strides = array<i32>} : memref<16x32xf32, #tpu.memory_space<vmem>>, vector<2x32xf32>,
    %c5_i32 = arith.constant 5 : i32
    %c2_i32_90 = arith.constant 2 : i32
    %198 = arith.muli %c5_i32, %c2_i32_90 : i32
    %c0_91 = arith.constant 0 : index
    %c0_92 = arith.constant 0 : index
    %199 = vector.load %arg12[%c0_91, %c0_92] : memref<2x32xf32, #tpu.memory_space<vmem>>, vector<2x32xf32>
    %200 = arith.index_cast %198 : i32 to index
    %c0_93 = arith.constant 0 : index
    %201 = vector.load %arg10[%200, %c0_93] : memref<16x128xf32, #tpu.memory_space<vmem>>, vector<2x128xf32>
    %202 = arith.truncf %199 : vector<2x32xf32> to vector<2x32xbf16>
    %cst_94 = arith.constant dense<0.000000e+00> : vector<2x128xf32>
    %203 = tpu.matmul %202, %12, %cst_94 {dimension_numbers = #tpu.dot_dimension_numbers<[1], [0], [0], [1], [0, 0, 1, 1], [], []>} : vector<2x32xbf16>, vector<32x128xbf16>, vector<2x128xf32> -> vector<2x128xf32>
    %204 = arith.addf %201, %203 : vector<2x128xf32>
    %205 = vector.extract_strided_slice %204 {offsets = [0, 0], sizes = [2, 32], strides = [1, 1]} : vector<2x128xf32> to vector<2x32xf32>
    %206 = arith.negf %205 : vector<2x32xf32>
    %207 = math.exp %206 : vector<2x32xf32>
    %cst_95 = arith.constant 1.000000e+00 : f32
    %208 = vector.broadcast %cst_95 : f32 to vector<2x32xf32>
    %209 = arith.addf %208, %207 : vector<2x32xf32>
    %210 = arith.divf %208, %209 : vector<2x32xf32>
    %211 = vector.extract_strided_slice %204 {offsets = [0, 32], sizes = [2, 32], strides = [1, 1]} : vector<2x128xf32> to vector<2x32xf32>
    %212 = arith.negf %211 : vector<2x32xf32>
    %213 = math.exp %212 : vector<2x32xf32>
    %cst_96 = arith.constant 1.000000e+00 : f32
    %214 = vector.broadcast %cst_96 : f32 to vector<2x32xf32>
    %215 = arith.addf %214, %213 : vector<2x32xf32>
    %216 = arith.divf %214, %215 : vector<2x32xf32>
    %217 = vector.extract_strided_slice %204 {offsets = [0, 64], sizes = [2, 32], strides = [1, 1]} : vector<2x128xf32> to vector<2x32xf32>
    %218 = math.tanh %217 : vector<2x32xf32>
    %219 = vector.extract_strided_slice %204 {offsets = [0, 96], sizes = [2, 32], strides = [1, 1]} : vector<2x128xf32> to vector<2x32xf32>
    %220 = arith.negf %219 : vector<2x32xf32>
    %221 = math.exp %220 : vector<2x32xf32>
    %cst_97 = arith.constant 1.000000e+00 : f32
    %222 = vector.broadcast %cst_97 : f32 to vector<2x32xf32>
    %223 = arith.addf %222, %221 : vector<2x32xf32>
    %224 = arith.divf %222, %223 : vector<2x32xf32>
    %c0_98 = arith.constant 0 : index
    %c0_99 = arith.constant 0 : index
    %225 = vector.load %arg13[%c0_98, %c0_99] : memref<2x32xf32, #tpu.memory_space<vmem>>, vector<2x32xf32>
    %226 = arith.mulf %216, %225 : vector<2x32xf32>
    %227 = arith.mulf %210, %218 : vector<2x32xf32>
    %228 = arith.addf %226, %227 : vector<2x32xf32>
    %229 = math.tanh %228 : vector<2x32xf32>
    %230 = arith.mulf %224, %229 : vector<2x32xf32>
    %c0_100 = arith.constant 0 : index
    %c0_101 = arith.constant 0 : index
    %231 = vector.load %arg13[%c0_100, %c0_101] : memref<2x32xf32, #tpu.memory_space<vmem>>, vector<2x32xf32>
    tpu.vector_store %arg13[%c0_100, %c0_101], %228 {strides = array<i32>} : memref<2x32xf32, #tpu.memory_space<vmem>>, vector<2x32xf32>,
    %c0_102 = arith.constant 0 : index
    %c0_103 = arith.constant 0 : index
    %232 = vector.load %arg12[%c0_102, %c0_103] : memref<2x32xf32, #tpu.memory_space<vmem>>, vector<2x32xf32>
    tpu.vector_store %arg12[%c0_102, %c0_103], %230 {strides = array<i32>} : memref<2x32xf32, #tpu.memory_space<vmem>>, vector<2x32xf32>,
    %233 = arith.index_cast %198 : i32 to index
    %c0_104 = arith.constant 0 : index
    %234 = vector.load %arg11[%233, %c0_104] : memref<16x32xf32, #tpu.memory_space<vmem>>, vector<2x32xf32>
    tpu.vector_store %arg11[%233, %c0_104], %230 {strides = array<i32>} : memref<16x32xf32, #tpu.memory_space<vmem>>, vector<2x32xf32>,
    %c6_i32 = arith.constant 6 : i32
    %c2_i32_105 = arith.constant 2 : i32
    %235 = arith.muli %c6_i32, %c2_i32_105 : i32
    %c0_106 = arith.constant 0 : index
    %c0_107 = arith.constant 0 : index
    %236 = vector.load %arg12[%c0_106, %c0_107] : memref<2x32xf32, #tpu.memory_space<vmem>>, vector<2x32xf32>
    %237 = arith.index_cast %235 : i32 to index
    %c0_108 = arith.constant 0 : index
    %238 = vector.load %arg10[%237, %c0_108] : memref<16x128xf32, #tpu.memory_space<vmem>>, vector<2x128xf32>
    %239 = arith.truncf %236 : vector<2x32xf32> to vector<2x32xbf16>
    %cst_109 = arith.constant dense<0.000000e+00> : vector<2x128xf32>
    %240 = tpu.matmul %239, %12, %cst_109 {dimension_numbers = #tpu.dot_dimension_numbers<[1], [0], [0], [1], [0, 0, 1, 1], [], []>} : vector<2x32xbf16>, vector<32x128xbf16>, vector<2x128xf32> -> vector<2x128xf32>
    %241 = arith.addf %238, %240 : vector<2x128xf32>
    %242 = vector.extract_strided_slice %241 {offsets = [0, 0], sizes = [2, 32], strides = [1, 1]} : vector<2x128xf32> to vector<2x32xf32>
    %243 = arith.negf %242 : vector<2x32xf32>
    %244 = math.exp %243 : vector<2x32xf32>
    %cst_110 = arith.constant 1.000000e+00 : f32
    %245 = vector.broadcast %cst_110 : f32 to vector<2x32xf32>
    %246 = arith.addf %245, %244 : vector<2x32xf32>
    %247 = arith.divf %245, %246 : vector<2x32xf32>
    %248 = vector.extract_strided_slice %241 {offsets = [0, 32], sizes = [2, 32], strides = [1, 1]} : vector<2x128xf32> to vector<2x32xf32>
    %249 = arith.negf %248 : vector<2x32xf32>
    %250 = math.exp %249 : vector<2x32xf32>
    %cst_111 = arith.constant 1.000000e+00 : f32
    %251 = vector.broadcast %cst_111 : f32 to vector<2x32xf32>
    %252 = arith.addf %251, %250 : vector<2x32xf32>
    %253 = arith.divf %251, %252 : vector<2x32xf32>
    %254 = vector.extract_strided_slice %241 {offsets = [0, 64], sizes = [2, 32], strides = [1, 1]} : vector<2x128xf32> to vector<2x32xf32>
    %255 = math.tanh %254 : vector<2x32xf32>
    %256 = vector.extract_strided_slice %241 {offsets = [0, 96], sizes = [2, 32], strides = [1, 1]} : vector<2x128xf32> to vector<2x32xf32>
    %257 = arith.negf %256 : vector<2x32xf32>
    %258 = math.exp %257 : vector<2x32xf32>
    %cst_112 = arith.constant 1.000000e+00 : f32
    %259 = vector.broadcast %cst_112 : f32 to vector<2x32xf32>
    %260 = arith.addf %259, %258 : vector<2x32xf32>
    %261 = arith.divf %259, %260 : vector<2x32xf32>
    %c0_113 = arith.constant 0 : index
    %c0_114 = arith.constant 0 : index
    %262 = vector.load %arg13[%c0_113, %c0_114] : memref<2x32xf32, #tpu.memory_space<vmem>>, vector<2x32xf32>
    %263 = arith.mulf %253, %262 : vector<2x32xf32>
    %264 = arith.mulf %247, %255 : vector<2x32xf32>
    %265 = arith.addf %263, %264 : vector<2x32xf32>
    %266 = math.tanh %265 : vector<2x32xf32>
    %267 = arith.mulf %261, %266 : vector<2x32xf32>
    %c0_115 = arith.constant 0 : index
    %c0_116 = arith.constant 0 : index
    %268 = vector.load %arg13[%c0_115, %c0_116] : memref<2x32xf32, #tpu.memory_space<vmem>>, vector<2x32xf32>
    tpu.vector_store %arg13[%c0_115, %c0_116], %265 {strides = array<i32>} : memref<2x32xf32, #tpu.memory_space<vmem>>, vector<2x32xf32>,
    %c0_117 = arith.constant 0 : index
    %c0_118 = arith.constant 0 : index
    %269 = vector.load %arg12[%c0_117, %c0_118] : memref<2x32xf32, #tpu.memory_space<vmem>>, vector<2x32xf32>
    tpu.vector_store %arg12[%c0_117, %c0_118], %267 {strides = array<i32>} : memref<2x32xf32, #tpu.memory_space<vmem>>, vector<2x32xf32>,
    %270 = arith.index_cast %235 : i32 to index
    %c0_119 = arith.constant 0 : index
    %271 = vector.load %arg11[%270, %c0_119] : memref<16x32xf32, #tpu.memory_space<vmem>>, vector<2x32xf32>
    tpu.vector_store %arg11[%270, %c0_119], %267 {strides = array<i32>} : memref<16x32xf32, #tpu.memory_space<vmem>>, vector<2x32xf32>,
    %c7_i32 = arith.constant 7 : i32
    %c2_i32_120 = arith.constant 2 : i32
    %272 = arith.muli %c7_i32, %c2_i32_120 : i32
    %c0_121 = arith.constant 0 : index
    %c0_122 = arith.constant 0 : index
    %273 = vector.load %arg12[%c0_121, %c0_122] : memref<2x32xf32, #tpu.memory_space<vmem>>, vector<2x32xf32>
    %274 = arith.index_cast %272 : i32 to index
    %c0_123 = arith.constant 0 : index
    %275 = vector.load %arg10[%274, %c0_123] : memref<16x128xf32, #tpu.memory_space<vmem>>, vector<2x128xf32>
    %276 = arith.truncf %273 : vector<2x32xf32> to vector<2x32xbf16>
    %cst_124 = arith.constant dense<0.000000e+00> : vector<2x128xf32>
    %277 = tpu.matmul %276, %12, %cst_124 {dimension_numbers = #tpu.dot_dimension_numbers<[1], [0], [0], [1], [0, 0, 1, 1], [], []>} : vector<2x32xbf16>, vector<32x128xbf16>, vector<2x128xf32> -> vector<2x128xf32>
    %278 = arith.addf %275, %277 : vector<2x128xf32>
    %279 = vector.extract_strided_slice %278 {offsets = [0, 0], sizes = [2, 32], strides = [1, 1]} : vector<2x128xf32> to vector<2x32xf32>
    %280 = arith.negf %279 : vector<2x32xf32>
    %281 = math.exp %280 : vector<2x32xf32>
    %cst_125 = arith.constant 1.000000e+00 : f32
    %282 = vector.broadcast %cst_125 : f32 to vector<2x32xf32>
    %283 = arith.addf %282, %281 : vector<2x32xf32>
    %284 = arith.divf %282, %283 : vector<2x32xf32>
    %285 = vector.extract_strided_slice %278 {offsets = [0, 32], sizes = [2, 32], strides = [1, 1]} : vector<2x128xf32> to vector<2x32xf32>
    %286 = arith.negf %285 : vector<2x32xf32>
    %287 = math.exp %286 : vector<2x32xf32>
    %cst_126 = arith.constant 1.000000e+00 : f32
    %288 = vector.broadcast %cst_126 : f32 to vector<2x32xf32>
    %289 = arith.addf %288, %287 : vector<2x32xf32>
    %290 = arith.divf %288, %289 : vector<2x32xf32>
    %291 = vector.extract_strided_slice %278 {offsets = [0, 64], sizes = [2, 32], strides = [1, 1]} : vector<2x128xf32> to vector<2x32xf32>
    %292 = math.tanh %291 : vector<2x32xf32>
    %293 = vector.extract_strided_slice %278 {offsets = [0, 96], sizes = [2, 32], strides = [1, 1]} : vector<2x128xf32> to vector<2x32xf32>
    %294 = arith.negf %293 : vector<2x32xf32>
    %295 = math.exp %294 : vector<2x32xf32>
    %cst_127 = arith.constant 1.000000e+00 : f32
    %296 = vector.broadcast %cst_127 : f32 to vector<2x32xf32>
    %297 = arith.addf %296, %295 : vector<2x32xf32>
    %298 = arith.divf %296, %297 : vector<2x32xf32>
    %c0_128 = arith.constant 0 : index
    %c0_129 = arith.constant 0 : index
    %299 = vector.load %arg13[%c0_128, %c0_129] : memref<2x32xf32, #tpu.memory_space<vmem>>, vector<2x32xf32>
    %300 = arith.mulf %290, %299 : vector<2x32xf32>
    %301 = arith.mulf %284, %292 : vector<2x32xf32>
    %302 = arith.addf %300, %301 : vector<2x32xf32>
    %303 = math.tanh %302 : vector<2x32xf32>
    %304 = arith.mulf %298, %303 : vector<2x32xf32>
    %c0_130 = arith.constant 0 : index
    %c0_131 = arith.constant 0 : index
    %305 = vector.load %arg13[%c0_130, %c0_131] : memref<2x32xf32, #tpu.memory_space<vmem>>, vector<2x32xf32>
    tpu.vector_store %arg13[%c0_130, %c0_131], %302 {strides = array<i32>} : memref<2x32xf32, #tpu.memory_space<vmem>>, vector<2x32xf32>,
    %c0_132 = arith.constant 0 : index
    %c0_133 = arith.constant 0 : index
    %306 = vector.load %arg12[%c0_132, %c0_133] : memref<2x32xf32, #tpu.memory_space<vmem>>, vector<2x32xf32>
    tpu.vector_store %arg12[%c0_132, %c0_133], %304 {strides = array<i32>} : memref<2x32xf32, #tpu.memory_space<vmem>>, vector<2x32xf32>,
    %307 = arith.index_cast %272 : i32 to index
    %c0_134 = arith.constant 0 : index
    %308 = vector.load %arg11[%307, %c0_134] : memref<16x32xf32, #tpu.memory_space<vmem>>, vector<2x32xf32>
    tpu.vector_store %arg11[%307, %c0_134], %304 {strides = array<i32>} : memref<16x32xf32, #tpu.memory_space<vmem>>, vector<2x32xf32>,
    %c8_i32 = arith.constant 8 : i32
    %c0_135 = arith.constant 0 : index
    %c0_136 = arith.constant 0 : index
    %309 = vector.load %arg11[%c0_135, %c0_136] : memref<16x32xf32, #tpu.memory_space<vmem>>, vector<16x32xf32>
    %310 = arith.truncf %309 : vector<16x32xf32> to vector<16x32xbf16>
    %c0_137 = arith.constant 0 : index
    %c0_138 = arith.constant 0 : index
    %311 = vector.load %arg4[%c0_137, %c0_138] : memref<32x128xbf16, #tpu.memory_space<vmem>>, vector<32x128xbf16>
    %cst_139 = arith.constant dense<0.000000e+00> : vector<16x128xf32>
    %312 = tpu.matmul %310, %311, %cst_139 {dimension_numbers = #tpu.dot_dimension_numbers<[1], [0], [0], [1], [0, 0, 1, 1], [], []>} : vector<16x32xbf16>, vector<32x128xbf16>, vector<16x128xf32> -> vector<16x128xf32>
    %c0_140 = arith.constant 0 : index
    %c0_141 = arith.constant 0 : index
    %313 = vector.load %arg6[%c0_140, %c0_141] : memref<1x128xf32, #tpu.memory_space<vmem>>, vector<1x128xf32>
    %314 = vector.broadcast %313 : vector<1x128xf32> to vector<16x128xf32>
    %315 = arith.addf %312, %314 : vector<16x128xf32>
    %c0_142 = arith.constant 0 : index
    %c0_143 = arith.constant 0 : index
    %316 = vector.load %arg10[%c0_142, %c0_143] : memref<16x128xf32, #tpu.memory_space<vmem>>, vector<16x128xf32>
    tpu.vector_store %arg10[%c0_142, %c0_143], %315 {strides = array<i32>} : memref<16x128xf32, #tpu.memory_space<vmem>>, vector<16x128xf32>,
    %cst_144 = arith.constant 0.000000e+00 : f32
    %317 = vector.broadcast %cst_144 : f32 to vector<2x32xf32>
    %c0_145 = arith.constant 0 : index
    %c0_146 = arith.constant 0 : index
    %318 = vector.load %arg12[%c0_145, %c0_146] : memref<2x32xf32, #tpu.memory_space<vmem>>, vector<2x32xf32>
    tpu.vector_store %arg12[%c0_145, %c0_146], %317 {strides = array<i32>} : memref<2x32xf32, #tpu.memory_space<vmem>>, vector<2x32xf32>,
    %cst_147 = arith.constant 0.000000e+00 : f32
    %319 = vector.broadcast %cst_147 : f32 to vector<2x32xf32>
    %c0_148 = arith.constant 0 : index
    %c0_149 = arith.constant 0 : index
    %320 = vector.load %arg13[%c0_148, %c0_149] : memref<2x32xf32, #tpu.memory_space<vmem>>, vector<2x32xf32>
    tpu.vector_store %arg13[%c0_148, %c0_149], %319 {strides = array<i32>} : memref<2x32xf32, #tpu.memory_space<vmem>>, vector<2x32xf32>,
    %c0_150 = arith.constant 0 : index
    %c0_151 = arith.constant 0 : index
    %321 = vector.load %arg5[%c0_150, %c0_151] : memref<32x128xbf16, #tpu.memory_space<vmem>>, vector<32x128xbf16>
    %c0_i32_152 = arith.constant 0 : i32
    %c2_i32_153 = arith.constant 2 : i32
    %322 = arith.muli %c0_i32_152, %c2_i32_153 : i32
    %c0_154 = arith.constant 0 : index
    %c0_155 = arith.constant 0 : index
    %323 = vector.load %arg12[%c0_154, %c0_155] : memref<2x32xf32, #tpu.memory_space<vmem>>, vector<2x32xf32>
    %324 = arith.index_cast %322 : i32 to index
    %c0_156 = arith.constant 0 : index
    %325 = vector.load %arg10[%324, %c0_156] : memref<16x128xf32, #tpu.memory_space<vmem>>, vector<2x128xf32>
    %326 = arith.truncf %323 : vector<2x32xf32> to vector<2x32xbf16>
    %cst_157 = arith.constant dense<0.000000e+00> : vector<2x128xf32>
    %327 = tpu.matmul %326, %321, %cst_157 {dimension_numbers = #tpu.dot_dimension_numbers<[1], [0], [0], [1], [0, 0, 1, 1], [], []>} : vector<2x32xbf16>, vector<32x128xbf16>, vector<2x128xf32> -> vector<2x128xf32>
    %328 = arith.addf %325, %327 : vector<2x128xf32>
    %329 = vector.extract_strided_slice %328 {offsets = [0, 0], sizes = [2, 32], strides = [1, 1]} : vector<2x128xf32> to vector<2x32xf32>
    %330 = arith.negf %329 : vector<2x32xf32>
    %331 = math.exp %330 : vector<2x32xf32>
    %cst_158 = arith.constant 1.000000e+00 : f32
    %332 = vector.broadcast %cst_158 : f32 to vector<2x32xf32>
    %333 = arith.addf %332, %331 : vector<2x32xf32>
    %334 = arith.divf %332, %333 : vector<2x32xf32>
    %335 = vector.extract_strided_slice %328 {offsets = [0, 32], sizes = [2, 32], strides = [1, 1]} : vector<2x128xf32> to vector<2x32xf32>
    %336 = arith.negf %335 : vector<2x32xf32>
    %337 = math.exp %336 : vector<2x32xf32>
    %cst_159 = arith.constant 1.000000e+00 : f32
    %338 = vector.broadcast %cst_159 : f32 to vector<2x32xf32>
    %339 = arith.addf %338, %337 : vector<2x32xf32>
    %340 = arith.divf %338, %339 : vector<2x32xf32>
    %341 = vector.extract_strided_slice %328 {offsets = [0, 64], sizes = [2, 32], strides = [1, 1]} : vector<2x128xf32> to vector<2x32xf32>
    %342 = math.tanh %341 : vector<2x32xf32>
    %343 = vector.extract_strided_slice %328 {offsets = [0, 96], sizes = [2, 32], strides = [1, 1]} : vector<2x128xf32> to vector<2x32xf32>
    %344 = arith.negf %343 : vector<2x32xf32>
    %345 = math.exp %344 : vector<2x32xf32>
    %cst_160 = arith.constant 1.000000e+00 : f32
    %346 = vector.broadcast %cst_160 : f32 to vector<2x32xf32>
    %347 = arith.addf %346, %345 : vector<2x32xf32>
    %348 = arith.divf %346, %347 : vector<2x32xf32>
    %c0_161 = arith.constant 0 : index
    %c0_162 = arith.constant 0 : index
    %349 = vector.load %arg13[%c0_161, %c0_162] : memref<2x32xf32, #tpu.memory_space<vmem>>, vector<2x32xf32>
    %350 = arith.mulf %340, %349 : vector<2x32xf32>
    %351 = arith.mulf %334, %342 : vector<2x32xf32>
    %352 = arith.addf %350, %351 : vector<2x32xf32>
    %353 = math.tanh %352 : vector<2x32xf32>
    %354 = arith.mulf %348, %353 : vector<2x32xf32>
    %c0_163 = arith.constant 0 : index
    %c0_164 = arith.constant 0 : index
    %355 = vector.load %arg13[%c0_163, %c0_164] : memref<2x32xf32, #tpu.memory_space<vmem>>, vector<2x32xf32>
    tpu.vector_store %arg13[%c0_163, %c0_164], %352 {strides = array<i32>} : memref<2x32xf32, #tpu.memory_space<vmem>>, vector<2x32xf32>,
    %c0_165 = arith.constant 0 : index
    %c0_166 = arith.constant 0 : index
    %356 = vector.load %arg12[%c0_165, %c0_166] : memref<2x32xf32, #tpu.memory_space<vmem>>, vector<2x32xf32>
    tpu.vector_store %arg12[%c0_165, %c0_166], %354 {strides = array<i32>} : memref<2x32xf32, #tpu.memory_space<vmem>>, vector<2x32xf32>,
    %c1_i32_167 = arith.constant 1 : i32
    %c2_i32_168 = arith.constant 2 : i32
    %357 = arith.muli %c1_i32_167, %c2_i32_168 : i32
    %c0_169 = arith.constant 0 : index
    %c0_170 = arith.constant 0 : index
    %358 = vector.load %arg12[%c0_169, %c0_170] : memref<2x32xf32, #tpu.memory_space<vmem>>, vector<2x32xf32>
    %359 = arith.index_cast %357 : i32 to index
    %c0_171 = arith.constant 0 : index
    %360 = vector.load %arg10[%359, %c0_171] : memref<16x128xf32, #tpu.memory_space<vmem>>, vector<2x128xf32>
    %361 = arith.truncf %358 : vector<2x32xf32> to vector<2x32xbf16>
    %cst_172 = arith.constant dense<0.000000e+00> : vector<2x128xf32>
    %362 = tpu.matmul %361, %321, %cst_172 {dimension_numbers = #tpu.dot_dimension_numbers<[1], [0], [0], [1], [0, 0, 1, 1], [], []>} : vector<2x32xbf16>, vector<32x128xbf16>, vector<2x128xf32> -> vector<2x128xf32>
    %363 = arith.addf %360, %362 : vector<2x128xf32>
    %364 = vector.extract_strided_slice %363 {offsets = [0, 0], sizes = [2, 32], strides = [1, 1]} : vector<2x128xf32> to vector<2x32xf32>
    %365 = arith.negf %364 : vector<2x32xf32>
    %366 = math.exp %365 : vector<2x32xf32>
    %cst_173 = arith.constant 1.000000e+00 : f32
    %367 = vector.broadcast %cst_173 : f32 to vector<2x32xf32>
    %368 = arith.addf %367, %366 : vector<2x32xf32>
    %369 = arith.divf %367, %368 : vector<2x32xf32>
    %370 = vector.extract_strided_slice %363 {offsets = [0, 32], sizes = [2, 32], strides = [1, 1]} : vector<2x128xf32> to vector<2x32xf32>
    %371 = arith.negf %370 : vector<2x32xf32>
    %372 = math.exp %371 : vector<2x32xf32>
    %cst_174 = arith.constant 1.000000e+00 : f32
    %373 = vector.broadcast %cst_174 : f32 to vector<2x32xf32>
    %374 = arith.addf %373, %372 : vector<2x32xf32>
    %375 = arith.divf %373, %374 : vector<2x32xf32>
    %376 = vector.extract_strided_slice %363 {offsets = [0, 64], sizes = [2, 32], strides = [1, 1]} : vector<2x128xf32> to vector<2x32xf32>
    %377 = math.tanh %376 : vector<2x32xf32>
    %378 = vector.extract_strided_slice %363 {offsets = [0, 96], sizes = [2, 32], strides = [1, 1]} : vector<2x128xf32> to vector<2x32xf32>
    %379 = arith.negf %378 : vector<2x32xf32>
    %380 = math.exp %379 : vector<2x32xf32>
    %cst_175 = arith.constant 1.000000e+00 : f32
    %381 = vector.broadcast %cst_175 : f32 to vector<2x32xf32>
    %382 = arith.addf %381, %380 : vector<2x32xf32>
    %383 = arith.divf %381, %382 : vector<2x32xf32>
    %c0_176 = arith.constant 0 : index
    %c0_177 = arith.constant 0 : index
    %384 = vector.load %arg13[%c0_176, %c0_177] : memref<2x32xf32, #tpu.memory_space<vmem>>, vector<2x32xf32>
    %385 = arith.mulf %375, %384 : vector<2x32xf32>
    %386 = arith.mulf %369, %377 : vector<2x32xf32>
    %387 = arith.addf %385, %386 : vector<2x32xf32>
    %388 = math.tanh %387 : vector<2x32xf32>
    %389 = arith.mulf %383, %388 : vector<2x32xf32>
    %c0_178 = arith.constant 0 : index
    %c0_179 = arith.constant 0 : index
    %390 = vector.load %arg13[%c0_178, %c0_179] : memref<2x32xf32, #tpu.memory_space<vmem>>, vector<2x32xf32>
    tpu.vector_store %arg13[%c0_178, %c0_179], %387 {strides = array<i32>} : memref<2x32xf32, #tpu.memory_space<vmem>>, vector<2x32xf32>,
    %c0_180 = arith.constant 0 : index
    %c0_181 = arith.constant 0 : index
    %391 = vector.load %arg12[%c0_180, %c0_181] : memref<2x32xf32, #tpu.memory_space<vmem>>, vector<2x32xf32>
    tpu.vector_store %arg12[%c0_180, %c0_181], %389 {strides = array<i32>} : memref<2x32xf32, #tpu.memory_space<vmem>>, vector<2x32xf32>,
    %c2_i32_182 = arith.constant 2 : i32
    %c2_i32_183 = arith.constant 2 : i32
    %392 = arith.muli %c2_i32_182, %c2_i32_183 : i32
    %c0_184 = arith.constant 0 : index
    %c0_185 = arith.constant 0 : index
    %393 = vector.load %arg12[%c0_184, %c0_185] : memref<2x32xf32, #tpu.memory_space<vmem>>, vector<2x32xf32>
    %394 = arith.index_cast %392 : i32 to index
    %c0_186 = arith.constant 0 : index
    %395 = vector.load %arg10[%394, %c0_186] : memref<16x128xf32, #tpu.memory_space<vmem>>, vector<2x128xf32>
    %396 = arith.truncf %393 : vector<2x32xf32> to vector<2x32xbf16>
    %cst_187 = arith.constant dense<0.000000e+00> : vector<2x128xf32>
    %397 = tpu.matmul %396, %321, %cst_187 {dimension_numbers = #tpu.dot_dimension_numbers<[1], [0], [0], [1], [0, 0, 1, 1], [], []>} : vector<2x32xbf16>, vector<32x128xbf16>, vector<2x128xf32> -> vector<2x128xf32>
    %398 = arith.addf %395, %397 : vector<2x128xf32>
    %399 = vector.extract_strided_slice %398 {offsets = [0, 0], sizes = [2, 32], strides = [1, 1]} : vector<2x128xf32> to vector<2x32xf32>
    %400 = arith.negf %399 : vector<2x32xf32>
    %401 = math.exp %400 : vector<2x32xf32>
    %cst_188 = arith.constant 1.000000e+00 : f32
    %402 = vector.broadcast %cst_188 : f32 to vector<2x32xf32>
    %403 = arith.addf %402, %401 : vector<2x32xf32>
    %404 = arith.divf %402, %403 : vector<2x32xf32>
    %405 = vector.extract_strided_slice %398 {offsets = [0, 32], sizes = [2, 32], strides = [1, 1]} : vector<2x128xf32> to vector<2x32xf32>
    %406 = arith.negf %405 : vector<2x32xf32>
    %407 = math.exp %406 : vector<2x32xf32>
    %cst_189 = arith.constant 1.000000e+00 : f32
    %408 = vector.broadcast %cst_189 : f32 to vector<2x32xf32>
    %409 = arith.addf %408, %407 : vector<2x32xf32>
    %410 = arith.divf %408, %409 : vector<2x32xf32>
    %411 = vector.extract_strided_slice %398 {offsets = [0, 64], sizes = [2, 32], strides = [1, 1]} : vector<2x128xf32> to vector<2x32xf32>
    %412 = math.tanh %411 : vector<2x32xf32>
    %413 = vector.extract_strided_slice %398 {offsets = [0, 96], sizes = [2, 32], strides = [1, 1]} : vector<2x128xf32> to vector<2x32xf32>
    %414 = arith.negf %413 : vector<2x32xf32>
    %415 = math.exp %414 : vector<2x32xf32>
    %cst_190 = arith.constant 1.000000e+00 : f32
    %416 = vector.broadcast %cst_190 : f32 to vector<2x32xf32>
    %417 = arith.addf %416, %415 : vector<2x32xf32>
    %418 = arith.divf %416, %417 : vector<2x32xf32>
    %c0_191 = arith.constant 0 : index
    %c0_192 = arith.constant 0 : index
    %419 = vector.load %arg13[%c0_191, %c0_192] : memref<2x32xf32, #tpu.memory_space<vmem>>, vector<2x32xf32>
    %420 = arith.mulf %410, %419 : vector<2x32xf32>
    %421 = arith.mulf %404, %412 : vector<2x32xf32>
    %422 = arith.addf %420, %421 : vector<2x32xf32>
    %423 = math.tanh %422 : vector<2x32xf32>
    %424 = arith.mulf %418, %423 : vector<2x32xf32>
    %c0_193 = arith.constant 0 : index
    %c0_194 = arith.constant 0 : index
    %425 = vector.load %arg13[%c0_193, %c0_194] : memref<2x32xf32, #tpu.memory_space<vmem>>, vector<2x32xf32>
    tpu.vector_store %arg13[%c0_193, %c0_194], %422 {strides = array<i32>} : memref<2x32xf32, #tpu.memory_space<vmem>>, vector<2x32xf32>,
    %c0_195 = arith.constant 0 : index
    %c0_196 = arith.constant 0 : index
    %426 = vector.load %arg12[%c0_195, %c0_196] : memref<2x32xf32, #tpu.memory_space<vmem>>, vector<2x32xf32>
    tpu.vector_store %arg12[%c0_195, %c0_196], %424 {strides = array<i32>} : memref<2x32xf32, #tpu.memory_space<vmem>>, vector<2x32xf32>,
    %c3_i32_197 = arith.constant 3 : i32
    %c2_i32_198 = arith.constant 2 : i32
    %427 = arith.muli %c3_i32_197, %c2_i32_198 : i32
    %c0_199 = arith.constant 0 : index
    %c0_200 = arith.constant 0 : index
    %428 = vector.load %arg12[%c0_199, %c0_200] : memref<2x32xf32, #tpu.memory_space<vmem>>, vector<2x32xf32>
    %429 = arith.index_cast %427 : i32 to index
    %c0_201 = arith.constant 0 : index
    %430 = vector.load %arg10[%429, %c0_201] : memref<16x128xf32, #tpu.memory_space<vmem>>, vector<2x128xf32>
    %431 = arith.truncf %428 : vector<2x32xf32> to vector<2x32xbf16>
    %cst_202 = arith.constant dense<0.000000e+00> : vector<2x128xf32>
    %432 = tpu.matmul %431, %321, %cst_202 {dimension_numbers = #tpu.dot_dimension_numbers<[1], [0], [0], [1], [0, 0, 1, 1], [], []>} : vector<2x32xbf16>, vector<32x128xbf16>, vector<2x128xf32> -> vector<2x128xf32>
    %433 = arith.addf %430, %432 : vector<2x128xf32>
    %434 = vector.extract_strided_slice %433 {offsets = [0, 0], sizes = [2, 32], strides = [1, 1]} : vector<2x128xf32> to vector<2x32xf32>
    %435 = arith.negf %434 : vector<2x32xf32>
    %436 = math.exp %435 : vector<2x32xf32>
    %cst_203 = arith.constant 1.000000e+00 : f32
    %437 = vector.broadcast %cst_203 : f32 to vector<2x32xf32>
    %438 = arith.addf %437, %436 : vector<2x32xf32>
    %439 = arith.divf %437, %438 : vector<2x32xf32>
    %440 = vector.extract_strided_slice %433 {offsets = [0, 32], sizes = [2, 32], strides = [1, 1]} : vector<2x128xf32> to vector<2x32xf32>
    %441 = arith.negf %440 : vector<2x32xf32>
    %442 = math.exp %441 : vector<2x32xf32>
    %cst_204 = arith.constant 1.000000e+00 : f32
    %443 = vector.broadcast %cst_204 : f32 to vector<2x32xf32>
    %444 = arith.addf %443, %442 : vector<2x32xf32>
    %445 = arith.divf %443, %444 : vector<2x32xf32>
    %446 = vector.extract_strided_slice %433 {offsets = [0, 64], sizes = [2, 32], strides = [1, 1]} : vector<2x128xf32> to vector<2x32xf32>
    %447 = math.tanh %446 : vector<2x32xf32>
    %448 = vector.extract_strided_slice %433 {offsets = [0, 96], sizes = [2, 32], strides = [1, 1]} : vector<2x128xf32> to vector<2x32xf32>
    %449 = arith.negf %448 : vector<2x32xf32>
    %450 = math.exp %449 : vector<2x32xf32>
    %cst_205 = arith.constant 1.000000e+00 : f32
    %451 = vector.broadcast %cst_205 : f32 to vector<2x32xf32>
    %452 = arith.addf %451, %450 : vector<2x32xf32>
    %453 = arith.divf %451, %452 : vector<2x32xf32>
    %c0_206 = arith.constant 0 : index
    %c0_207 = arith.constant 0 : index
    %454 = vector.load %arg13[%c0_206, %c0_207] : memref<2x32xf32, #tpu.memory_space<vmem>>, vector<2x32xf32>
    %455 = arith.mulf %445, %454 : vector<2x32xf32>
    %456 = arith.mulf %439, %447 : vector<2x32xf32>
    %457 = arith.addf %455, %456 : vector<2x32xf32>
    %458 = math.tanh %457 : vector<2x32xf32>
    %459 = arith.mulf %453, %458 : vector<2x32xf32>
    %c0_208 = arith.constant 0 : index
    %c0_209 = arith.constant 0 : index
    %460 = vector.load %arg13[%c0_208, %c0_209] : memref<2x32xf32, #tpu.memory_space<vmem>>, vector<2x32xf32>
    tpu.vector_store %arg13[%c0_208, %c0_209], %457 {strides = array<i32>} : memref<2x32xf32, #tpu.memory_space<vmem>>, vector<2x32xf32>,
    %c0_210 = arith.constant 0 : index
    %c0_211 = arith.constant 0 : index
    %461 = vector.load %arg12[%c0_210, %c0_211] : memref<2x32xf32, #tpu.memory_space<vmem>>, vector<2x32xf32>
    tpu.vector_store %arg12[%c0_210, %c0_211], %459 {strides = array<i32>} : memref<2x32xf32, #tpu.memory_space<vmem>>, vector<2x32xf32>,
    %c4_i32_212 = arith.constant 4 : i32
    %c2_i32_213 = arith.constant 2 : i32
    %462 = arith.muli %c4_i32_212, %c2_i32_213 : i32
    %c0_214 = arith.constant 0 : index
    %c0_215 = arith.constant 0 : index
    %463 = vector.load %arg12[%c0_214, %c0_215] : memref<2x32xf32, #tpu.memory_space<vmem>>, vector<2x32xf32>
    %464 = arith.index_cast %462 : i32 to index
    %c0_216 = arith.constant 0 : index
    %465 = vector.load %arg10[%464, %c0_216] : memref<16x128xf32, #tpu.memory_space<vmem>>, vector<2x128xf32>
    %466 = arith.truncf %463 : vector<2x32xf32> to vector<2x32xbf16>
    %cst_217 = arith.constant dense<0.000000e+00> : vector<2x128xf32>
    %467 = tpu.matmul %466, %321, %cst_217 {dimension_numbers = #tpu.dot_dimension_numbers<[1], [0], [0], [1], [0, 0, 1, 1], [], []>} : vector<2x32xbf16>, vector<32x128xbf16>, vector<2x128xf32> -> vector<2x128xf32>
    %468 = arith.addf %465, %467 : vector<2x128xf32>
    %469 = vector.extract_strided_slice %468 {offsets = [0, 0], sizes = [2, 32], strides = [1, 1]} : vector<2x128xf32> to vector<2x32xf32>
    %470 = arith.negf %469 : vector<2x32xf32>
    %471 = math.exp %470 : vector<2x32xf32>
    %cst_218 = arith.constant 1.000000e+00 : f32
    %472 = vector.broadcast %cst_218 : f32 to vector<2x32xf32>
    %473 = arith.addf %472, %471 : vector<2x32xf32>
    %474 = arith.divf %472, %473 : vector<2x32xf32>
    %475 = vector.extract_strided_slice %468 {offsets = [0, 32], sizes = [2, 32], strides = [1, 1]} : vector<2x128xf32> to vector<2x32xf32>
    %476 = arith.negf %475 : vector<2x32xf32>
    %477 = math.exp %476 : vector<2x32xf32>
    %cst_219 = arith.constant 1.000000e+00 : f32
    %478 = vector.broadcast %cst_219 : f32 to vector<2x32xf32>
    %479 = arith.addf %478, %477 : vector<2x32xf32>
    %480 = arith.divf %478, %479 : vector<2x32xf32>
    %481 = vector.extract_strided_slice %468 {offsets = [0, 64], sizes = [2, 32], strides = [1, 1]} : vector<2x128xf32> to vector<2x32xf32>
    %482 = math.tanh %481 : vector<2x32xf32>
    %483 = vector.extract_strided_slice %468 {offsets = [0, 96], sizes = [2, 32], strides = [1, 1]} : vector<2x128xf32> to vector<2x32xf32>
    %484 = arith.negf %483 : vector<2x32xf32>
    %485 = math.exp %484 : vector<2x32xf32>
    %cst_220 = arith.constant 1.000000e+00 : f32
    %486 = vector.broadcast %cst_220 : f32 to vector<2x32xf32>
    %487 = arith.addf %486, %485 : vector<2x32xf32>
    %488 = arith.divf %486, %487 : vector<2x32xf32>
    %c0_221 = arith.constant 0 : index
    %c0_222 = arith.constant 0 : index
    %489 = vector.load %arg13[%c0_221, %c0_222] : memref<2x32xf32, #tpu.memory_space<vmem>>, vector<2x32xf32>
    %490 = arith.mulf %480, %489 : vector<2x32xf32>
    %491 = arith.mulf %474, %482 : vector<2x32xf32>
    %492 = arith.addf %490, %491 : vector<2x32xf32>
    %493 = math.tanh %492 : vector<2x32xf32>
    %494 = arith.mulf %488, %493 : vector<2x32xf32>
    %c0_223 = arith.constant 0 : index
    %c0_224 = arith.constant 0 : index
    %495 = vector.load %arg13[%c0_223, %c0_224] : memref<2x32xf32, #tpu.memory_space<vmem>>, vector<2x32xf32>
    tpu.vector_store %arg13[%c0_223, %c0_224], %492 {strides = array<i32>} : memref<2x32xf32, #tpu.memory_space<vmem>>, vector<2x32xf32>,
    %c0_225 = arith.constant 0 : index
    %c0_226 = arith.constant 0 : index
    %496 = vector.load %arg12[%c0_225, %c0_226] : memref<2x32xf32, #tpu.memory_space<vmem>>, vector<2x32xf32>
    tpu.vector_store %arg12[%c0_225, %c0_226], %494 {strides = array<i32>} : memref<2x32xf32, #tpu.memory_space<vmem>>, vector<2x32xf32>,
    %c5_i32_227 = arith.constant 5 : i32
    %c2_i32_228 = arith.constant 2 : i32
    %497 = arith.muli %c5_i32_227, %c2_i32_228 : i32
    %c0_229 = arith.constant 0 : index
    %c0_230 = arith.constant 0 : index
    %498 = vector.load %arg12[%c0_229, %c0_230] : memref<2x32xf32, #tpu.memory_space<vmem>>, vector<2x32xf32>
    %499 = arith.index_cast %497 : i32 to index
    %c0_231 = arith.constant 0 : index
    %500 = vector.load %arg10[%499, %c0_231] : memref<16x128xf32, #tpu.memory_space<vmem>>, vector<2x128xf32>
    %501 = arith.truncf %498 : vector<2x32xf32> to vector<2x32xbf16>
    %cst_232 = arith.constant dense<0.000000e+00> : vector<2x128xf32>
    %502 = tpu.matmul %501, %321, %cst_232 {dimension_numbers = #tpu.dot_dimension_numbers<[1], [0], [0], [1], [0, 0, 1, 1], [], []>} : vector<2x32xbf16>, vector<32x128xbf16>, vector<2x128xf32> -> vector<2x128xf32>
    %503 = arith.addf %500, %502 : vector<2x128xf32>
    %504 = vector.extract_strided_slice %503 {offsets = [0, 0], sizes = [2, 32], strides = [1, 1]} : vector<2x128xf32> to vector<2x32xf32>
    %505 = arith.negf %504 : vector<2x32xf32>
    %506 = math.exp %505 : vector<2x32xf32>
    %cst_233 = arith.constant 1.000000e+00 : f32
    %507 = vector.broadcast %cst_233 : f32 to vector<2x32xf32>
    %508 = arith.addf %507, %506 : vector<2x32xf32>
    %509 = arith.divf %507, %508 : vector<2x32xf32>
    %510 = vector.extract_strided_slice %503 {offsets = [0, 32], sizes = [2, 32], strides = [1, 1]} : vector<2x128xf32> to vector<2x32xf32>
    %511 = arith.negf %510 : vector<2x32xf32>
    %512 = math.exp %511 : vector<2x32xf32>
    %cst_234 = arith.constant 1.000000e+00 : f32
    %513 = vector.broadcast %cst_234 : f32 to vector<2x32xf32>
    %514 = arith.addf %513, %512 : vector<2x32xf32>
    %515 = arith.divf %513, %514 : vector<2x32xf32>
    %516 = vector.extract_strided_slice %503 {offsets = [0, 64], sizes = [2, 32], strides = [1, 1]} : vector<2x128xf32> to vector<2x32xf32>
    %517 = math.tanh %516 : vector<2x32xf32>
    %518 = vector.extract_strided_slice %503 {offsets = [0, 96], sizes = [2, 32], strides = [1, 1]} : vector<2x128xf32> to vector<2x32xf32>
    %519 = arith.negf %518 : vector<2x32xf32>
    %520 = math.exp %519 : vector<2x32xf32>
    %cst_235 = arith.constant 1.000000e+00 : f32
    %521 = vector.broadcast %cst_235 : f32 to vector<2x32xf32>
    %522 = arith.addf %521, %520 : vector<2x32xf32>
    %523 = arith.divf %521, %522 : vector<2x32xf32>
    %c0_236 = arith.constant 0 : index
    %c0_237 = arith.constant 0 : index
    %524 = vector.load %arg13[%c0_236, %c0_237] : memref<2x32xf32, #tpu.memory_space<vmem>>, vector<2x32xf32>
    %525 = arith.mulf %515, %524 : vector<2x32xf32>
    %526 = arith.mulf %509, %517 : vector<2x32xf32>
    %527 = arith.addf %525, %526 : vector<2x32xf32>
    %528 = math.tanh %527 : vector<2x32xf32>
    %529 = arith.mulf %523, %528 : vector<2x32xf32>
    %c0_238 = arith.constant 0 : index
    %c0_239 = arith.constant 0 : index
    %530 = vector.load %arg13[%c0_238, %c0_239] : memref<2x32xf32, #tpu.memory_space<vmem>>, vector<2x32xf32>
    tpu.vector_store %arg13[%c0_238, %c0_239], %527 {strides = array<i32>} : memref<2x32xf32, #tpu.memory_space<vmem>>, vector<2x32xf32>,
    %c0_240 = arith.constant 0 : index
    %c0_241 = arith.constant 0 : index
    %531 = vector.load %arg12[%c0_240, %c0_241] : memref<2x32xf32, #tpu.memory_space<vmem>>, vector<2x32xf32>
    tpu.vector_store %arg12[%c0_240, %c0_241], %529 {strides = array<i32>} : memref<2x32xf32, #tpu.memory_space<vmem>>, vector<2x32xf32>,
    %c6_i32_242 = arith.constant 6 : i32
    %c2_i32_243 = arith.constant 2 : i32
    %532 = arith.muli %c6_i32_242, %c2_i32_243 : i32
    %c0_244 = arith.constant 0 : index
    %c0_245 = arith.constant 0 : index
    %533 = vector.load %arg12[%c0_244, %c0_245] : memref<2x32xf32, #tpu.memory_space<vmem>>, vector<2x32xf32>
    %534 = arith.index_cast %532 : i32 to index
    %c0_246 = arith.constant 0 : index
    %535 = vector.load %arg10[%534, %c0_246] : memref<16x128xf32, #tpu.memory_space<vmem>>, vector<2x128xf32>
    %536 = arith.truncf %533 : vector<2x32xf32> to vector<2x32xbf16>
    %cst_247 = arith.constant dense<0.000000e+00> : vector<2x128xf32>
    %537 = tpu.matmul %536, %321, %cst_247 {dimension_numbers = #tpu.dot_dimension_numbers<[1], [0], [0], [1], [0, 0, 1, 1], [], []>} : vector<2x32xbf16>, vector<32x128xbf16>, vector<2x128xf32> -> vector<2x128xf32>
    %538 = arith.addf %535, %537 : vector<2x128xf32>
    %539 = vector.extract_strided_slice %538 {offsets = [0, 0], sizes = [2, 32], strides = [1, 1]} : vector<2x128xf32> to vector<2x32xf32>
    %540 = arith.negf %539 : vector<2x32xf32>
    %541 = math.exp %540 : vector<2x32xf32>
    %cst_248 = arith.constant 1.000000e+00 : f32
    %542 = vector.broadcast %cst_248 : f32 to vector<2x32xf32>
    %543 = arith.addf %542, %541 : vector<2x32xf32>
    %544 = arith.divf %542, %543 : vector<2x32xf32>
    %545 = vector.extract_strided_slice %538 {offsets = [0, 32], sizes = [2, 32], strides = [1, 1]} : vector<2x128xf32> to vector<2x32xf32>
    %546 = arith.negf %545 : vector<2x32xf32>
    %547 = math.exp %546 : vector<2x32xf32>
    %cst_249 = arith.constant 1.000000e+00 : f32
    %548 = vector.broadcast %cst_249 : f32 to vector<2x32xf32>
    %549 = arith.addf %548, %547 : vector<2x32xf32>
    %550 = arith.divf %548, %549 : vector<2x32xf32>
    %551 = vector.extract_strided_slice %538 {offsets = [0, 64], sizes = [2, 32], strides = [1, 1]} : vector<2x128xf32> to vector<2x32xf32>
    %552 = math.tanh %551 : vector<2x32xf32>
    %553 = vector.extract_strided_slice %538 {offsets = [0, 96], sizes = [2, 32], strides = [1, 1]} : vector<2x128xf32> to vector<2x32xf32>
    %554 = arith.negf %553 : vector<2x32xf32>
    %555 = math.exp %554 : vector<2x32xf32>
    %cst_250 = arith.constant 1.000000e+00 : f32
    %556 = vector.broadcast %cst_250 : f32 to vector<2x32xf32>
    %557 = arith.addf %556, %555 : vector<2x32xf32>
    %558 = arith.divf %556, %557 : vector<2x32xf32>
    %c0_251 = arith.constant 0 : index
    %c0_252 = arith.constant 0 : index
    %559 = vector.load %arg13[%c0_251, %c0_252] : memref<2x32xf32, #tpu.memory_space<vmem>>, vector<2x32xf32>
    %560 = arith.mulf %550, %559 : vector<2x32xf32>
    %561 = arith.mulf %544, %552 : vector<2x32xf32>
    %562 = arith.addf %560, %561 : vector<2x32xf32>
    %563 = math.tanh %562 : vector<2x32xf32>
    %564 = arith.mulf %558, %563 : vector<2x32xf32>
    %c0_253 = arith.constant 0 : index
    %c0_254 = arith.constant 0 : index
    %565 = vector.load %arg13[%c0_253, %c0_254] : memref<2x32xf32, #tpu.memory_space<vmem>>, vector<2x32xf32>
    tpu.vector_store %arg13[%c0_253, %c0_254], %562 {strides = array<i32>} : memref<2x32xf32, #tpu.memory_space<vmem>>, vector<2x32xf32>,
    %c0_255 = arith.constant 0 : index
    %c0_256 = arith.constant 0 : index
    %566 = vector.load %arg12[%c0_255, %c0_256] : memref<2x32xf32, #tpu.memory_space<vmem>>, vector<2x32xf32>
    tpu.vector_store %arg12[%c0_255, %c0_256], %564 {strides = array<i32>} : memref<2x32xf32, #tpu.memory_space<vmem>>, vector<2x32xf32>,
    %c7_i32_257 = arith.constant 7 : i32
    %c2_i32_258 = arith.constant 2 : i32
    %567 = arith.muli %c7_i32_257, %c2_i32_258 : i32
    %c0_259 = arith.constant 0 : index
    %c0_260 = arith.constant 0 : index
    %568 = vector.load %arg12[%c0_259, %c0_260] : memref<2x32xf32, #tpu.memory_space<vmem>>, vector<2x32xf32>
    %569 = arith.index_cast %567 : i32 to index
    %c0_261 = arith.constant 0 : index
    %570 = vector.load %arg10[%569, %c0_261] : memref<16x128xf32, #tpu.memory_space<vmem>>, vector<2x128xf32>
    %571 = arith.truncf %568 : vector<2x32xf32> to vector<2x32xbf16>
    %cst_262 = arith.constant dense<0.000000e+00> : vector<2x128xf32>
    %572 = tpu.matmul %571, %321, %cst_262 {dimension_numbers = #tpu.dot_dimension_numbers<[1], [0], [0], [1], [0, 0, 1, 1], [], []>} : vector<2x32xbf16>, vector<32x128xbf16>, vector<2x128xf32> -> vector<2x128xf32>
    %573 = arith.addf %570, %572 : vector<2x128xf32>
    %574 = vector.extract_strided_slice %573 {offsets = [0, 0], sizes = [2, 32], strides = [1, 1]} : vector<2x128xf32> to vector<2x32xf32>
    %575 = arith.negf %574 : vector<2x32xf32>
    %576 = math.exp %575 : vector<2x32xf32>
    %cst_263 = arith.constant 1.000000e+00 : f32
    %577 = vector.broadcast %cst_263 : f32 to vector<2x32xf32>
    %578 = arith.addf %577, %576 : vector<2x32xf32>
    %579 = arith.divf %577, %578 : vector<2x32xf32>
    %580 = vector.extract_strided_slice %573 {offsets = [0, 32], sizes = [2, 32], strides = [1, 1]} : vector<2x128xf32> to vector<2x32xf32>
    %581 = arith.negf %580 : vector<2x32xf32>
    %582 = math.exp %581 : vector<2x32xf32>
    %cst_264 = arith.constant 1.000000e+00 : f32
    %583 = vector.broadcast %cst_264 : f32 to vector<2x32xf32>
    %584 = arith.addf %583, %582 : vector<2x32xf32>
    %585 = arith.divf %583, %584 : vector<2x32xf32>
    %586 = vector.extract_strided_slice %573 {offsets = [0, 64], sizes = [2, 32], strides = [1, 1]} : vector<2x128xf32> to vector<2x32xf32>
    %587 = math.tanh %586 : vector<2x32xf32>
    %588 = vector.extract_strided_slice %573 {offsets = [0, 96], sizes = [2, 32], strides = [1, 1]} : vector<2x128xf32> to vector<2x32xf32>
    %589 = arith.negf %588 : vector<2x32xf32>
    %590 = math.exp %589 : vector<2x32xf32>
    %cst_265 = arith.constant 1.000000e+00 : f32
    %591 = vector.broadcast %cst_265 : f32 to vector<2x32xf32>
    %592 = arith.addf %591, %590 : vector<2x32xf32>
    %593 = arith.divf %591, %592 : vector<2x32xf32>
    %c0_266 = arith.constant 0 : index
    %c0_267 = arith.constant 0 : index
    %594 = vector.load %arg13[%c0_266, %c0_267] : memref<2x32xf32, #tpu.memory_space<vmem>>, vector<2x32xf32>
    %595 = arith.mulf %585, %594 : vector<2x32xf32>
    %596 = arith.mulf %579, %587 : vector<2x32xf32>
    %597 = arith.addf %595, %596 : vector<2x32xf32>
    %598 = math.tanh %597 : vector<2x32xf32>
    %599 = arith.mulf %593, %598 : vector<2x32xf32>
    %c0_268 = arith.constant 0 : index
    %c0_269 = arith.constant 0 : index
    %600 = vector.load %arg13[%c0_268, %c0_269] : memref<2x32xf32, #tpu.memory_space<vmem>>, vector<2x32xf32>
    tpu.vector_store %arg13[%c0_268, %c0_269], %597 {strides = array<i32>} : memref<2x32xf32, #tpu.memory_space<vmem>>, vector<2x32xf32>,
    %c0_270 = arith.constant 0 : index
    %c0_271 = arith.constant 0 : index
    %601 = vector.load %arg12[%c0_270, %c0_271] : memref<2x32xf32, #tpu.memory_space<vmem>>, vector<2x32xf32>
    tpu.vector_store %arg12[%c0_270, %c0_271], %599 {strides = array<i32>} : memref<2x32xf32, #tpu.memory_space<vmem>>, vector<2x32xf32>,
    %c8_i32_272 = arith.constant 8 : i32
    %c0_273 = arith.constant 0 : index
    %c0_274 = arith.constant 0 : index
    %602 = vector.load %arg12[%c0_273, %c0_274] : memref<2x32xf32, #tpu.memory_space<vmem>>, vector<2x32xf32>
    %c0_275 = arith.constant 0 : index
    %c0_276 = arith.constant 0 : index
    %603 = vector.load %arg7[%c0_275, %c0_276] : memref<1x32xf32, #tpu.memory_space<vmem>>, vector<1x32xf32>
    %604 = vector.broadcast %603 : vector<1x32xf32> to vector<2x32xf32>
    %605 = arith.mulf %602, %604 : vector<2x32xf32>
    %cst_277 = arith.constant dense<0.000000e+00> : vector<2xf32>
    %606 = vector.multi_reduction <add>, %605, %cst_277 [1] : vector<2x32xf32> to vector<2xf32>
    %607 = vector.shape_cast %606 : vector<2xf32> to vector<2x1xf32>
    %c0_278 = arith.constant 0 : index
    %c0_279 = arith.constant 0 : index
    %608 = vector.load %arg8[%c0_278, %c0_279] : memref<1x1xf32, #tpu.memory_space<vmem>>, vector<1x1xf32>
    %609 = vector.broadcast %608 : vector<1x1xf32> to vector<2x1xf32>
    %610 = arith.addf %607, %609 : vector<2x1xf32>
    %c0_280 = arith.constant 0 : index
    %c0_281 = arith.constant 0 : index
    %611 = vector.load %arg9[%c0_280, %c0_281] : memref<2x1xf32, #tpu.memory_space<vmem>>, vector<2x1xf32>
    tpu.vector_store %arg9[%c0_280, %c0_281], %610 {strides = array<i32>} : memref<2x1xf32, #tpu.memory_space<vmem>>, vector<2x1xf32>,
    return
  }
}

</mosaic_0001>

<llo_original>
// kernel: lstm_forward.1
$region0: #{lstm_forward.1}
  #allocation0 [shape = 'u32[]', space=smem, size = 0x4, offset = 0x4, fixed_abs, tag = 'smem constant byte address 0x4 - core index']
  #allocation1 [shape = 'u32[72,128]{1,0:T(1,128)}', space=vmem, size = 0x9000, scoped, tag = 'internal scratch']
  #allocation2 [shape = 'f32[16,128]{1,0:T(8,128)}', space=vmem, size = 0x2000, scoped, tag = 'scratch operand']
  #allocation3 [shape = 'f32[16,32]{1,0:T(8,128)}', space=vmem, size = 0x2000, scoped, tag = 'scratch operand']
  #allocation4 [shape = 'f32[2,32]{1,0:T(2,128)}', space=vmem, size = 0x400, scoped, tag = 'scratch operand']
  #allocation5 [shape = 'f32[2,32]{1,0:T(2,128)}', space=vmem, size = 0x400, scoped, tag = 'scratch operand']
  #allocation6 [shape = 'f32[1,1]{1,0:T(1,128)S(1)}', space=vmem, size = 0x200, scoped, tag = 'scoped memory for lstm_forward.1']
  %s0 = inlined_call_operand.vmem [shape: f32[16,4], index: 0, kind: input, shape index: {}]
  %s1 = inlined_call_operand.vmem [shape: bf16[4,128], index: 1, kind: input, shape index: {}]
  %s2 = inlined_call_operand.vmem [shape: bf16[32,128], index: 2, kind: input, shape index: {}]
  %s3 = inlined_call_operand.vmem [shape: f32[1,128], index: 3, kind: input, shape index: {}]
  %s4 = inlined_call_operand.vmem [shape: bf16[32,128], index: 4, kind: input, shape index: {}]
  %s5 = inlined_call_operand.vmem [shape: bf16[32,128], index: 5, kind: input, shape index: {}]
  %s6 = inlined_call_operand.vmem [shape: f32[1,128], index: 6, kind: input, shape index: {}]
  %s7 = inlined_call_operand.vmem [shape: f32[1,32], index: 7, kind: input, shape index: {}]
  %s8 = inlined_call_operand.<no memory space> [shape: f32[1,1], index: 8, kind: input, shape index: {}]
  %s9 = inlined_call_operand.vmem [shape: f32[2,1], index: 9, kind: output, shape index: {}]
  %s10 = sld [smem:[#allocation0]]
  $region46: #{lstm_forward.1} parent=0
    _
  %s12 = ssub.s32 1, %s10
  %s13 = scalar_select 0, %s12, %s10
  %v14 = vstv %s8
  %15 = vst [vmem:[#allocation6] sm:$0x1] %v14
  // Predicated region
  $region2: #{lstm_forward.1} parent=0 // pred_check
    _
  $region3: #{lstm_forward.1} parent=0 // pred_check_branch
    %17 = sbr.rel (0) target = $region5
  $region4: #{lstm_forward.1} parent=0 // pred_region
    _
  $region5: #{lstm_forward.1} parent=0 // pred_fallthru
    _
  // Predicated region
  $region6: #{lstm_forward.1} parent=0 // pred_check
    _
  $region7: #{lstm_forward.1} parent=0 // pred_check_branch
    %19 = sbr.rel (0) target = $region9
  $region8: #{lstm_forward.1} parent=0 // pred_region
    _
  $region9: #{lstm_forward.1} parent=0 // pred_fallthru
    _
  // Predicated region
  $region10: #{lstm_forward.1} parent=0 // pred_check
    _
  $region11: #{lstm_forward.1} parent=0 // pred_check_branch
    %21 = sbr.rel (0) target = $region13
  $region12: #{lstm_forward.1} parent=0 // pred_region
    _
  $region13: #{lstm_forward.1} parent=0 // pred_fallthru
    _
  // Predicated region
  $region14: #{lstm_forward.1} parent=0 // pred_check
    _
  $region15: #{lstm_forward.1} parent=0 // pred_check_branch
    %23 = sbr.rel (0) target = $region17
  $region16: #{lstm_forward.1} parent=0 // pred_region
    _
  $region17: #{lstm_forward.1} parent=0 // pred_fallthru
    _
  // Predicated region
  $region18: #{lstm_forward.1} parent=0 // pred_check
    _
  $region19: #{lstm_forward.1} parent=0 // pred_check_branch
    %25 = sbr.rel (0) target = $region21
  $region20: #{lstm_forward.1} parent=0 // pred_region
    _
  $region21: #{lstm_forward.1} parent=0 // pred_fallthru
    _
  // Predicated region
  $region22: #{lstm_forward.1} parent=0 // pred_check
    _
  $region23: #{lstm_forward.1} parent=0 // pred_check_branch
    %27 = sbr.rel (0) target = $region25
  $region24: #{lstm_forward.1} parent=0 // pred_region
    _
  $region25: #{lstm_forward.1} parent=0 // pred_fallthru
    _
  // Predicated region
  $region26: #{lstm_forward.1} parent=0 // pred_check
    _
  $region27: #{lstm_forward.1} parent=0 // pred_check_branch
    %29 = sbr.rel (0) target = $region29
  $region28: #{lstm_forward.1} parent=0 // pred_region
    _
  $region29: #{lstm_forward.1} parent=0 // pred_fallthru
    _
  // Predicated region
  $region30: #{lstm_forward.1} parent=0 // pred_check
    _
  $region31: #{lstm_forward.1} parent=0 // pred_check_branch
    %31 = sbr.rel (0) target = $region33
  $region32: #{lstm_forward.1} parent=0 // pred_region
    _
  $region33: #{lstm_forward.1} parent=0 // pred_fallthru
    _
  // Predicated region
  $region34: #{lstm_forward.1} parent=0 // pred_check
    _
  $region35: #{lstm_forward.1} parent=0 // pred_check_branch
    %33 = sbr.rel (0) target = $region37
  $region36: #{lstm_forward.1} parent=0 // pred_region
    _
  $region37: #{lstm_forward.1} parent=0 // pred_fallthru
    _
  %v35 = vld [vmem:[%s0] sm:$0xff]
  %v36 = vld [vmem:[%s0 + $0x8] sm:$0xff]
  %v37 = vpack.c.bf16 %v36, %v35
  %v38 = vld [vmem:[%s1] sm:$0x3]
  %v39 = vld [vmem:[%s3] sm:$0x1]
  %v41 = vperm.slane %v39, 0
  %vm43 = vcmask 31744
  %v45 = vsel %vm43, %v37, 0
  %vm47 = vcmask 1041408
  %v49 = vsel %vm47, %v38, 0
  %51 = vmatpush.bf16.msra.mxu0 0
  %52 = vmatpush.bf16.msra.mxu0 0
  %53 = vmatpush.bf16.msra.mxu0 0
  %54 = vmatpush.bf16.msra.mxu0 0
  %55 = vmatpush.bf16.msra.mxu0 0
  %56 = vmatpush.bf16.msra.mxu0 0
  %57 = vmatpush.bf16.msra.mxu0 0
  %58 = vmatpush.bf16.msra.mxu0 %v49
  %59 = vmatmul.bf16.gmra.mxu0 %v45
  %v60 = vpop.f32.mrf.mxu0
  %v61 = vadd.f32 %v41, %v60
  %v62 = vpop.f32.mrf.mxu0
  %v63 = vadd.f32 %v41, %v62
  %64 = vdwg.mxu0
  %65 = vst [vmem:[#allocation2] sm:$0xff] %v61
  %66 = vst [vmem:[#allocation2 + $0x8] sm:$0xff] %v63
  %vm67 = vcmask 254976
  %68 = vst.msk [vmem:[#allocation4] sm:$0x3] %vm67, 0.0
  %69 = vst.msk [vmem:[#allocation5] sm:$0x3] %vm67, 0.0
  %v70 = vld [vmem:[%s2] sm:$0xf]
  %v71 = vld [vmem:[%s2 + $0x4] sm:$0xf]
  %v72 = vld [vmem:[%s2 + $0x8] sm:$0xf]
  %v73 = vld [vmem:[%s2 + $0xc] sm:$0xf]
  %v74 = vld [vmem:[#allocation4] sm:$0x3]
  %v75 = vld [vmem:[#allocation2] sm:$0x3]
  %v76 = vpack.c.bf16 %v74, %v74
  %v81 = vunpack.c.l.b16 %v70
  %v82 = vunpack.c.l.b16 %v71
  %v83 = vunpack.c.l.b16 %v72
  %v84 = vunpack.c.l.b16 %v73
  %v85 = vpack.c.b16 %v82, %v81
  %v86 = vpack.c.b16 %v84, %v83
  %vm89 = vcmask 261120
  %v91 = vsel %vm89, %v76, 0
  %93 = vmatpush.bf16.msra.mxu0 0
  %94 = vmatpush.bf16.msra.mxu0 0
  %95 = vmatpush.bf16.msra.mxu0 0
  %96 = vmatpush.bf16.msra.mxu0 0
  %97 = vmatpush.bf16.msra.mxu0 0
  %98 = vmatpush.bf16.msra.mxu0 0
  %99 = vmatpush.bf16.msra.mxu0 %v86
  %100 = vmatpush.bf16.msra.mxu0 %v85
  %101 = vmatmul.bf16.gmra.mxu0 %v91
  %v102 = vpop.f32.mrf.mxu0
  %v103 = vadd.f32 0.0, %v102
  %v104 = vpop.f32.mrf.mxu0
  %105 = vdwg.mxu0
  %v106 = vadd.f32 %v75, %v103
  %v107 = vxor.u32 %v106, 2147483648
  %v108 = vmul.f32 %v107, 1.442695
  %v109 = vpow.pop %v108
  %v110 = vadd.f32 %v109, 1.0
  %v111 = vrcp.pop %v110
  %v112 = vmul.f32 %v110, %v111
  %v113 = vsub.f32 1.0, %v112
  %v114 = vmul.f32 %v111, %v113
  %v115 = vadd.f32 %v111, %v114
  %vm116 = vweird.f32 %v110
  %vm117 = vweird.f32 %v111
  %vm118 = vmor %vm116, %vm117
  %v119 = vsel %vm118, %v111, %v115
  %v120 = vand.u32 2147483647, %v110
  %vm121 = vcmp.eq.f32.partialorder %v120, 8.507059e+37
  %v122 = vand.u32 %v110, 2147483648
  %v123 = vor.u32 1.1754944e-38, %v122
  %v124 = vsel %vm121, %v123, %v119
  %v125 = vmul.f32 1.0, %v124
  %v126 = vtanh.pop %v106
  %v127 = vld [vmem:[#allocation5] sm:$0x3]
  %129 = vrot.lane.b32.xlu0 %v127, 32
  %v130 = vpop.permute.xlu0 %129
  %v132 = vmul.f32 %v125, %v130
  %134 = vrot.lane.b32.xlu0 %v126, 64
  %v135 = vpop.permute.xlu0 %134
  %v137 = vmul.f32 %v125, %v135
  %139 = vrot.lane.b32.xlu0 %v137, 32
  %v140 = vpop.permute.xlu0 %139
  %v142 = vadd.f32 %v132, %v140
  %v143 = vtanh.pop %v142
  %145 = vrot.lane.b32.xlu0 %v143, 64
  %v146 = vpop.permute.xlu0 %145
  %v148 = vmul.f32 %v125, %v146
  %150 = vrot.lane.b32.xlu0 %v142, 96
  %v151 = vpop.permute.xlu0 %150
  %153 = vst.msk [vmem:[#allocation5] sm:$0x3] %vm67, %v151
  %155 = vrot.lane.b32.xlu0 %v148, 32
  %v156 = vpop.permute.xlu0 %155
  %158 = vst.msk [vmem:[#allocation4] sm:$0x3] %vm67, %v156
  %159 = vst.msk [vmem:[#allocation3] sm:$0x3] %vm67, %v156
  %v160 = vld [vmem:[#allocation4] sm:$0x3]
  %v161 = vld [vmem:[#allocation2 + $0x2] sm:$0x3]
  %v162 = vpack.c.bf16 %v160, %v160
  %v164 = vsel %vm89, %v162, 0
  %166 = vmatpush.bf16.msra.mxu0 0
  %167 = vmatpush.bf16.msra.mxu0 0
  %168 = vmatpush.bf16.msra.mxu0 0
  %169 = vmatpush.bf16.msra.mxu0 0
  %170 = vmatpush.bf16.msra.mxu0 0
  %171 = vmatpush.bf16.msra.mxu0 0
  %172 = vmatpush.bf16.msra.mxu0 %v86
  %173 = vmatpush.bf16.msra.mxu0 %v85
  %174 = vmatmul.bf16.gmra.mxu0 %v164
  %v175 = vpop.f32.mrf.mxu0
  %v176 = vadd.f32 0.0, %v175
  %v177 = vpop.f32.mrf.mxu0
  %178 = vdwg.mxu0
  %v179 = vadd.f32 %v161, %v176
  %v180 = vxor.u32 %v179, 2147483648
  %v181 = vmul.f32 %v180, 1.442695
  %v182 = vpow.pop %v181
  %v183 = vadd.f32 %v182, 1.0
  %v184 = vrcp.pop %v183
  %v185 = vmul.f32 %v183, %v184
  %v186 = vsub.f32 1.0, %v185
  %v187 = vmul.f32 %v184, %v186
  %v188 = vadd.f32 %v184, %v187
  %vm189 = vweird.f32 %v183
  %vm190 = vweird.f32 %v184
  %vm191 = vmor %vm189, %vm190
  %v192 = vsel %vm191, %v184, %v188
  %v193 = vand.u32 2147483647, %v183
  %vm194 = vcmp.eq.f32.partialorder %v193, 8.507059e+37
  %v195 = vand.u32 %v183, 2147483648
  %v196 = vor.u32 1.1754944e-38, %v195
  %v197 = vsel %vm194, %v196, %v192
  %v198 = vmul.f32 1.0, %v197
  %v199 = vtanh.pop %v179
  %v200 = vld [vmem:[#allocation5] sm:$0x3]
  %202 = vrot.lane.b32.xlu0 %v200, 32
  %v203 = vpop.permute.xlu0 %202
  %v205 = vmul.f32 %v198, %v203
  %207 = vrot.lane.b32.xlu0 %v199, 64
  %v208 = vpop.permute.xlu0 %207
  %v210 = vmul.f32 %v198, %v208
  %212 = vrot.lane.b32.xlu0 %v210, 32
  %v213 = vpop.permute.xlu0 %212
  %v215 = vadd.f32 %v205, %v213
  %v216 = vtanh.pop %v215
  %218 = vrot.lane.b32.xlu0 %v216, 64
  %v219 = vpop.permute.xlu0 %218
  %v221 = vmul.f32 %v198, %v219
  %223 = vrot.lane.b32.xlu0 %v215, 96
  %v224 = vpop.permute.xlu0 %223
  %226 = vst.msk [vmem:[#allocation5] sm:$0x3] %vm67, %v224
  %228 = vrot.lane.b32.xlu0 %v221, 32
  %v229 = vpop.permute.xlu0 %228
  %231 = vst.msk [vmem:[#allocation4] sm:$0x3] %vm67, %v229
  %232 = vst.msk [vmem:[#allocation3 + $0x2] sm:$0x3] %vm67, %v229
  %v233 = vld [vmem:[#allocation4] sm:$0x3]
  %v234 = vld [vmem:[#allocation2 + $0x4] sm:$0x3]
  %v235 = vpack.c.bf16 %v233, %v233
  %v237 = vsel %vm89, %v235, 0
  %239 = vmatpush.bf16.msra.mxu0 0
  %240 = vmatpush.bf16.msra.mxu0 0
  %241 = vmatpush.bf16.msra.mxu0 0
  %242 = vmatpush.bf16.msra.mxu0 0
  %243 = vmatpush.bf16.msra.mxu0 0
  %244 = vmatpush.bf16.msra.mxu0 0
  %245 = vmatpush.bf16.msra.mxu0 %v86
  %246 = vmatpush.bf16.msra.mxu0 %v85
  %247 = vmatmul.bf16.gmra.mxu0 %v237
  %v248 = vpop.f32.mrf.mxu0
  %v249 = vadd.f32 0.0, %v248
  %v250 = vpop.f32.mrf.mxu0
  %251 = vdwg.mxu0
  %v252 = vadd.f32 %v234, %v249
  %v253 = vxor.u32 %v252, 2147483648
  %v254 = vmul.f32 %v253, 1.442695
  %v255 = vpow.pop %v254
  %v256 = vadd.f32 %v255, 1.0
  %v257 = vrcp.pop %v256
  %v258 = vmul.f32 %v256, %v257
  %v259 = vsub.f32 1.0, %v258
  %v260 = vmul.f32 %v257, %v259
  %v261 = vadd.f32 %v257, %v260
  %vm262 = vweird.f32 %v256
  %vm263 = vweird.f32 %v257
  %vm264 = vmor %vm262, %vm263
  %v265 = vsel %vm264, %v257, %v261
  %v266 = vand.u32 2147483647, %v256
  %vm267 = vcmp.eq.f32.partialorder %v266, 8.507059e+37
  %v268 = vand.u32 %v256, 2147483648
  %v269 = vor.u32 1.1754944e-38, %v268
  %v270 = vsel %vm267, %v269, %v265
  %v271 = vmul.f32 1.0, %v270
  %v272 = vtanh.pop %v252
  %v273 = vld [vmem:[#allocation5] sm:$0x3]
  %275 = vrot.lane.b32.xlu0 %v273, 32
  %v276 = vpop.permute.xlu0 %275
  %v278 = vmul.f32 %v271, %v276
  %280 = vrot.lane.b32.xlu0 %v272, 64
  %v281 = vpop.permute.xlu0 %280
  %v283 = vmul.f32 %v271, %v281
  %285 = vrot.lane.b32.xlu0 %v283, 32
  %v286 = vpop.permute.xlu0 %285
  %v288 = vadd.f32 %v278, %v286
  %v289 = vtanh.pop %v288
  %291 = vrot.lane.b32.xlu0 %v289, 64
  %v292 = vpop.permute.xlu0 %291
  %v294 = vmul.f32 %v271, %v292
  %296 = vrot.lane.b32.xlu0 %v288, 96
  %v297 = vpop.permute.xlu0 %296
  %299 = vst.msk [vmem:[#allocation5] sm:$0x3] %vm67, %v297
  %301 = vrot.lane.b32.xlu0 %v294, 32
  %v302 = vpop.permute.xlu0 %301
  %304 = vst.msk [vmem:[#allocation4] sm:$0x3] %vm67, %v302
  %305 = vst.msk [vmem:[#allocation3 + $0x4] sm:$0x3] %vm67, %v302
  %v306 = vld [vmem:[#allocation4] sm:$0x3]
  %v307 = vld [vmem:[#allocation2 + $0x6] sm:$0x3]
  %v308 = vpack.c.bf16 %v306, %v306
  %v310 = vsel %vm89, %v308, 0
  %312 = vmatpush.bf16.msra.mxu0 0
  %313 = vmatpush.bf16.msra.mxu0 0
  %314 = vmatpush.bf16.msra.mxu0 0
  %315 = vmatpush.bf16.msra.mxu0 0
  %316 = vmatpush.bf16.msra.mxu0 0
  %317 = vmatpush.bf16.msra.mxu0 0
  %318 = vmatpush.bf16.msra.mxu0 %v86
  %319 = vmatpush.bf16.msra.mxu0 %v85
  %320 = vmatmul.bf16.gmra.mxu0 %v310
  %v321 = vpop.f32.mrf.mxu0
  %v322 = vadd.f32 0.0, %v321
  %v323 = vpop.f32.mrf.mxu0
  %324 = vdwg.mxu0
  %v325 = vadd.f32 %v307, %v322
  %v326 = vxor.u32 %v325, 2147483648
  %v327 = vmul.f32 %v326, 1.442695
  %v328 = vpow.pop %v327
  %v329 = vadd.f32 %v328, 1.0
  %v330 = vrcp.pop %v329
  %v331 = vmul.f32 %v329, %v330
  %v332 = vsub.f32 1.0, %v331
  %v333 = vmul.f32 %v330, %v332
  %v334 = vadd.f32 %v330, %v333
  %vm335 = vweird.f32 %v329
  %vm336 = vweird.f32 %v330
  %vm337 = vmor %vm335, %vm336
  %v338 = vsel %vm337, %v330, %v334
  %v339 = vand.u32 2147483647, %v329
  %vm340 = vcmp.eq.f32.partialorder %v339, 8.507059e+37
  %v341 = vand.u32 %v329, 2147483648
  %v342 = vor.u32 1.1754944e-38, %v341
  %v343 = vsel %vm340, %v342, %v338
  %v344 = vmul.f32 1.0, %v343
  %v345 = vtanh.pop %v325
  %v346 = vld [vmem:[#allocation5] sm:$0x3]
  %348 = vrot.lane.b32.xlu0 %v346, 32
  %v349 = vpop.permute.xlu0 %348
  %v351 = vmul.f32 %v344, %v349
  %353 = vrot.lane.b32.xlu0 %v345, 64
  %v354 = vpop.permute.xlu0 %353
  %v356 = vmul.f32 %v344, %v354
  %358 = vrot.lane.b32.xlu0 %v356, 32
  %v359 = vpop.permute.xlu0 %358
  %v361 = vadd.f32 %v351, %v359
  %v362 = vtanh.pop %v361
  %364 = vrot.lane.b32.xlu0 %v362, 64
  %v365 = vpop.permute.xlu0 %364
  %v367 = vmul.f32 %v344, %v365
  %369 = vrot.lane.b32.xlu0 %v361, 96
  %v370 = vpop.permute.xlu0 %369
  %372 = vst.msk [vmem:[#allocation5] sm:$0x3] %vm67, %v370
  %374 = vrot.lane.b32.xlu0 %v367, 32
  %v375 = vpop.permute.xlu0 %374
  %377 = vst.msk [vmem:[#allocation4] sm:$0x3] %vm67, %v375
  %378 = vst.msk [vmem:[#allocation3 + $0x6] sm:$0x3] %vm67, %v375
  %v379 = vld [vmem:[#allocation4] sm:$0x3]
  %v380 = vld [vmem:[#allocation2 + $0x8] sm:$0x3]
  %v381 = vpack.c.bf16 %v379, %v379
  %v383 = vsel %vm89, %v381, 0
  %385 = vmatpush.bf16.msra.mxu0 0
  %386 = vmatpush.bf16.msra.mxu0 0
  %387 = vmatpush.bf16.msra.mxu0 0
  %388 = vmatpush.bf16.msra.mxu0 0
  %389 = vmatpush.bf16.msra.mxu0 0
  %390 = vmatpush.bf16.msra.mxu0 0
  %391 = vmatpush.bf16.msra.mxu0 %v86
  %392 = vmatpush.bf16.msra.mxu0 %v85
  %393 = vmatmul.bf16.gmra.mxu0 %v383
  %v394 = vpop.f32.mrf.mxu0
  %v395 = vadd.f32 0.0, %v394
  %v396 = vpop.f32.mrf.mxu0
  %397 = vdwg.mxu0
  %v398 = vadd.f32 %v380, %v395
  %v399 = vxor.u32 %v398, 2147483648
  %v400 = vmul.f32 %v399, 1.442695
  %v401 = vpow.pop %v400
  %v402 = vadd.f32 %v401, 1.0
  %v403 = vrcp.pop %v402
  %v404 = vmul.f32 %v402, %v403
  %v405 = vsub.f32 1.0, %v404
  %v406 = vmul.f32 %v403, %v405
  %v407 = vadd.f32 %v403, %v406
  %vm408 = vweird.f32 %v402
  %vm409 = vweird.f32 %v403
  %vm410 = vmor %vm408, %vm409
  %v411 = vsel %vm410, %v403, %v407
  %v412 = vand.u32 2147483647, %v402
  %vm413 = vcmp.eq.f32.partialorder %v412, 8.507059e+37
  %v414 = vand.u32 %v402, 2147483648
  %v415 = vor.u32 1.1754944e-38, %v414
  %v416 = vsel %vm413, %v415, %v411
  %v417 = vmul.f32 1.0, %v416
  %v418 = vtanh.pop %v398
  %v419 = vld [vmem:[#allocation5] sm:$0x3]
  %421 = vrot.lane.b32.xlu0 %v419, 32
  %v422 = vpop.permute.xlu0 %421
  %v424 = vmul.f32 %v417, %v422
  %426 = vrot.lane.b32.xlu0 %v418, 64
  %v427 = vpop.permute.xlu0 %426
  %v429 = vmul.f32 %v417, %v427
  %431 = vrot.lane.b32.xlu0 %v429, 32
  %v432 = vpop.permute.xlu0 %431
  %v434 = vadd.f32 %v424, %v432
  %v435 = vtanh.pop %v434
  %437 = vrot.lane.b32.xlu0 %v435, 64
  %v438 = vpop.permute.xlu0 %437
  %v440 = vmul.f32 %v417, %v438
  %442 = vrot.lane.b32.xlu0 %v434, 96
  %v443 = vpop.permute.xlu0 %442
  %445 = vst.msk [vmem:[#allocation5] sm:$0x3] %vm67, %v443
  %447 = vrot.lane.b32.xlu0 %v440, 32
  %v448 = vpop.permute.xlu0 %447
  %450 = vst.msk [vmem:[#allocation4] sm:$0x3] %vm67, %v448
  %451 = vst.msk [vmem:[#allocation3 + $0x8] sm:$0x3] %vm67, %v448
  %v452 = vld [vmem:[#allocation4] sm:$0x3]
  %v453 = vld [vmem:[#allocation2 + $0xa] sm:$0x3]
  %v454 = vpack.c.bf16 %v452, %v452
  %v456 = vsel %vm89, %v454, 0
  %458 = vmatpush.bf16.msra.mxu0 0
  %459 = vmatpush.bf16.msra.mxu0 0
  %460 = vmatpush.bf16.msra.mxu0 0
  %461 = vmatpush.bf16.msra.mxu0 0
  %462 = vmatpush.bf16.msra.mxu0 0
  %463 = vmatpush.bf16.msra.mxu0 0
  %464 = vmatpush.bf16.msra.mxu0 %v86
  %465 = vmatpush.bf16.msra.mxu0 %v85
  %466 = vmatmul.bf16.gmra.mxu0 %v456
  %v467 = vpop.f32.mrf.mxu0
  %v468 = vadd.f32 0.0, %v467
  %v469 = vpop.f32.mrf.mxu0
  %470 = vdwg.mxu0
  %v471 = vadd.f32 %v453, %v468
  %v472 = vxor.u32 %v471, 2147483648
  %v473 = vmul.f32 %v472, 1.442695
  %v474 = vpow.pop %v473
  %v475 = vadd.f32 %v474, 1.0
  %v476 = vrcp.pop %v475
  %v477 = vmul.f32 %v475, %v476
  %v478 = vsub.f32 1.0, %v477
  %v479 = vmul.f32 %v476, %v478
  %v480 = vadd.f32 %v476, %v479
  %vm481 = vweird.f32 %v475
  %vm482 = vweird.f32 %v476
  %vm483 = vmor %vm481, %vm482
  %v484 = vsel %vm483, %v476, %v480
  %v485 = vand.u32 2147483647, %v475
  %vm486 = vcmp.eq.f32.partialorder %v485, 8.507059e+37
  %v487 = vand.u32 %v475, 2147483648
  %v488 = vor.u32 1.1754944e-38, %v487
  %v489 = vsel %vm486, %v488, %v484
  %v490 = vmul.f32 1.0, %v489
  %v491 = vtanh.pop %v471
  %v492 = vld [vmem:[#allocation5] sm:$0x3]
  %494 = vrot.lane.b32.xlu0 %v492, 32
  %v495 = vpop.permute.xlu0 %494
  %v497 = vmul.f32 %v490, %v495
  %499 = vrot.lane.b32.xlu0 %v491, 64
  %v500 = vpop.permute.xlu0 %499
  %v502 = vmul.f32 %v490, %v500
  %504 = vrot.lane.b32.xlu0 %v502, 32
  %v505 = vpop.permute.xlu0 %504
  %v507 = vadd.f32 %v497, %v505
  %v508 = vtanh.pop %v507
  %510 = vrot.lane.b32.xlu0 %v508, 64
  %v511 = vpop.permute.xlu0 %510
  %v513 = vmul.f32 %v490, %v511
  %515 = vrot.lane.b32.xlu0 %v507, 96
  %v516 = vpop.permute.xlu0 %515
  %518 = vst.msk [vmem:[#allocation5] sm:$0x3] %vm67, %v516
  %520 = vrot.lane.b32.xlu0 %v513, 32
  %v521 = vpop.permute.xlu0 %520
  %523 = vst.msk [vmem:[#allocation4] sm:$0x3] %vm67, %v521
  %524 = vst.msk [vmem:[#allocation3 + $0xa] sm:$0x3] %vm67, %v521
  %v525 = vld [vmem:[#allocation4] sm:$0x3]
  %v526 = vld [vmem:[#allocation2 + $0xc] sm:$0x3]
  %v527 = vpack.c.bf16 %v525, %v525
  %v529 = vsel %vm89, %v527, 0
  %531 = vmatpush.bf16.msra.mxu0 0
  %532 = vmatpush.bf16.msra.mxu0 0
  %533 = vmatpush.bf16.msra.mxu0 0
  %534 = vmatpush.bf16.msra.mxu0 0
  %535 = vmatpush.bf16.msra.mxu0 0
  %536 = vmatpush.bf16.msra.mxu0 0
  %537 = vmatpush.bf16.msra.mxu0 %v86
  %538 = vmatpush.bf16.msra.mxu0 %v85
  %539 = vmatmul.bf16.gmra.mxu0 %v529
  %v540 = vpop.f32.mrf.mxu0
  %v541 = vadd.f32 0.0, %v540
  %v542 = vpop.f32.mrf.mxu0
  %543 = vdwg.mxu0
  %v544 = vadd.f32 %v526, %v541
  %v545 = vxor.u32 %v544, 2147483648
  %v546 = vmul.f32 %v545, 1.442695
  %v547 = vpow.pop %v546
  %v548 = vadd.f32 %v547, 1.0
  %v549 = vrcp.pop %v548
  %v550 = vmul.f32 %v548, %v549
  %v551 = vsub.f32 1.0, %v550
  %v552 = vmul.f32 %v549, %v551
  %v553 = vadd.f32 %v549, %v552
  %vm554 = vweird.f32 %v548
  %vm555 = vweird.f32 %v549
  %vm556 = vmor %vm554, %vm555
  %v557 = vsel %vm556, %v549, %v553
  %v558 = vand.u32 2147483647, %v548
  %vm559 = vcmp.eq.f32.partialorder %v558, 8.507059e+37
  %v560 = vand.u32 %v548, 2147483648
  %v561 = vor.u32 1.1754944e-38, %v560
  %v562 = vsel %vm559, %v561, %v557
  %v563 = vmul.f32 1.0, %v562
  %v564 = vtanh.pop %v544
  %v565 = vld [vmem:[#allocation5] sm:$0x3]
  %567 = vrot.lane.b32.xlu0 %v565, 32
  %v568 = vpop.permute.xlu0 %567
  %v570 = vmul.f32 %v563, %v568
  %572 = vrot.lane.b32.xlu0 %v564, 64
  %v573 = vpop.permute.xlu0 %572
  %v575 = vmul.f32 %v563, %v573
  %577 = vrot.lane.b32.xlu0 %v575, 32
  %v578 = vpop.permute.xlu0 %577
  %v580 = vadd.f32 %v570, %v578
  %v581 = vtanh.pop %v580
  %583 = vrot.lane.b32.xlu0 %v581, 64
  %v584 = vpop.permute.xlu0 %583
  %v586 = vmul.f32 %v563, %v584
  %588 = vrot.lane.b32.xlu0 %v580, 96
  %v589 = vpop.permute.xlu0 %588
  %591 = vst.msk [vmem:[#allocation5] sm:$0x3] %vm67, %v589
  %593 = vrot.lane.b32.xlu0 %v586, 32
  %v594 = vpop.permute.xlu0 %593
  %596 = vst.msk [vmem:[#allocation4] sm:$0x3] %vm67, %v594
  %597 = vst.msk [vmem:[#allocation3 + $0xc] sm:$0x3] %vm67, %v594
  %v598 = vld [vmem:[#allocation4] sm:$0x3]
  %v599 = vld [vmem:[#allocation2 + $0xe] sm:$0x3]
  %v600 = vpack.c.bf16 %v598, %v598
  %v602 = vsel %vm89, %v600, 0
  %604 = vmatpush.bf16.msra.mxu0 0
  %605 = vmatpush.bf16.msra.mxu0 0
  %606 = vmatpush.bf16.msra.mxu0 0
  %607 = vmatpush.bf16.msra.mxu0 0
  %608 = vmatpush.bf16.msra.mxu0 0
  %609 = vmatpush.bf16.msra.mxu0 0
  %610 = vmatpush.bf16.msra.mxu0 %v86
  %611 = vmatpush.bf16.msra.mxu0 %v85
  %612 = vmatmul.bf16.gmra.mxu0 %v602
  %v613 = vpop.f32.mrf.mxu0
  %v614 = vadd.f32 0.0, %v613
  %v615 = vpop.f32.mrf.mxu0
  %616 = vdwg.mxu0
  %v617 = vadd.f32 %v599, %v614
  %v618 = vxor.u32 %v617, 2147483648
  %v619 = vmul.f32 %v618, 1.442695
  %v620 = vpow.pop %v619
  %v621 = vadd.f32 %v620, 1.0
  %v622 = vrcp.pop %v621
  %v623 = vmul.f32 %v621, %v622
  %v624 = vsub.f32 1.0, %v623
  %v625 = vmul.f32 %v622, %v624
  %v626 = vadd.f32 %v622, %v625
  %vm627 = vweird.f32 %v621
  %vm628 = vweird.f32 %v622
  %vm629 = vmor %vm627, %vm628
  %v630 = vsel %vm629, %v622, %v626
  %v631 = vand.u32 2147483647, %v621
  %vm632 = vcmp.eq.f32.partialorder %v631, 8.507059e+37
  %v633 = vand.u32 %v621, 2147483648
  %v634 = vor.u32 1.1754944e-38, %v633
  %v635 = vsel %vm632, %v634, %v630
  %v636 = vmul.f32 1.0, %v635
  %v637 = vtanh.pop %v617
  %v638 = vld [vmem:[#allocation5] sm:$0x3]
  %640 = vrot.lane.b32.xlu0 %v638, 32
  %v641 = vpop.permute.xlu0 %640
  %v643 = vmul.f32 %v636, %v641
  %645 = vrot.lane.b32.xlu0 %v637, 64
  %v646 = vpop.permute.xlu0 %645
  %v648 = vmul.f32 %v636, %v646
  %650 = vrot.lane.b32.xlu0 %v648, 32
  %v651 = vpop.permute.xlu0 %650
  %v653 = vadd.f32 %v643, %v651
  %v654 = vtanh.pop %v653
  %656 = vrot.lane.b32.xlu0 %v654, 64
  %v657 = vpop.permute.xlu0 %656
  %v659 = vmul.f32 %v636, %v657
  %661 = vrot.lane.b32.xlu0 %v653, 96
  %v662 = vpop.permute.xlu0 %661
  %664 = vst.msk [vmem:[#allocation5] sm:$0x3] %vm67, %v662
  %666 = vrot.lane.b32.xlu0 %v659, 32
  %v667 = vpop.permute.xlu0 %666
  %669 = vst.msk [vmem:[#allocation4] sm:$0x3] %vm67, %v667
  %670 = vst.msk [vmem:[#allocation3 + $0xe] sm:$0x3] %vm67, %v667
  %v671 = vld [vmem:[#allocation3] sm:$0xff]
  %v672 = vld [vmem:[#allocation3 + $0x8] sm:$0xff]
  %v673 = vpack.c.bf16 %v672, %v671
  %v674 = vld [vmem:[%s4] sm:$0xf]
  %v675 = vld [vmem:[%s4 + $0x4] sm:$0xf]
  %v676 = vld [vmem:[%s4 + $0x8] sm:$0xf]
  %v677 = vld [vmem:[%s4 + $0xc] sm:$0xf]
  %v678 = vld [vmem:[%s6] sm:$0x1]
  %v680 = vperm.slane %v678, 0
  %v686 = vunpack.c.l.b16 %v674
  %v687 = vunpack.c.l.b16 %v675
  %v688 = vunpack.c.l.b16 %v676
  %v689 = vunpack.c.l.b16 %v677
  %v690 = vpack.c.b16 %v687, %v686
  %v691 = vpack.c.b16 %v689, %v688
  %v695 = vsel %vm89, %v673, 0
  %697 = vmatpush.bf16.msra.mxu0 0
  %698 = vmatpush.bf16.msra.mxu0 0
  %699 = vmatpush.bf16.msra.mxu0 0
  %700 = vmatpush.bf16.msra.mxu0 0
  %701 = vmatpush.bf16.msra.mxu0 0
  %702 = vmatpush.bf16.msra.mxu0 0
  %703 = vmatpush.bf16.msra.mxu0 %v691
  %704 = vmatpush.bf16.msra.mxu0 %v690
  %705 = vmatmul.bf16.gmra.mxu0 %v695
  %v706 = vpop.f32.mrf.mxu0
  %v707 = vadd.f32 %v680, %v706
  %v708 = vpop.f32.mrf.mxu0
  %v709 = vadd.f32 %v680, %v708
  %710 = vdwg.mxu0
  %711 = vst [vmem:[#allocation2] sm:$0xff] %v707
  %712 = vst [vmem:[#allocation2 + $0x8] sm:$0xff] %v709
  %713 = vst.msk [vmem:[#allocation4] sm:$0x3] %vm67, 0.0
  %714 = vst.msk [vmem:[#allocation5] sm:$0x3] %vm67, 0.0
  %v715 = vld [vmem:[%s5] sm:$0xf]
  %v716 = vld [vmem:[%s5 + $0x4] sm:$0xf]
  %v717 = vld [vmem:[%s5 + $0x8] sm:$0xf]
  %v718 = vld [vmem:[%s5 + $0xc] sm:$0xf]
  %v719 = vld [vmem:[#allocation4] sm:$0x3]
  %v720 = vld [vmem:[#allocation2] sm:$0x3]
  %v721 = vpack.c.bf16 %v719, %v719
  %v726 = vunpack.c.l.b16 %v715
  %v727 = vunpack.c.l.b16 %v716
  %v728 = vunpack.c.l.b16 %v717
  %v729 = vunpack.c.l.b16 %v718
  %v730 = vpack.c.b16 %v727, %v726
  %v731 = vpack.c.b16 %v729, %v728
  %v735 = vsel %vm89, %v721, 0
  %737 = vmatpush.bf16.msra.mxu0 0
  %738 = vmatpush.bf16.msra.mxu0 0
  %739 = vmatpush.bf16.msra.mxu0 0
  %740 = vmatpush.bf16.msra.mxu0 0
  %741 = vmatpush.bf16.msra.mxu0 0
  %742 = vmatpush.bf16.msra.mxu0 0
  %743 = vmatpush.bf16.msra.mxu0 %v731
  %744 = vmatpush.bf16.msra.mxu0 %v730
  %745 = vmatmul.bf16.gmra.mxu0 %v735
  %v746 = vpop.f32.mrf.mxu0
  %v747 = vadd.f32 0.0, %v746
  %v748 = vpop.f32.mrf.mxu0
  %749 = vdwg.mxu0
  %v750 = vadd.f32 %v720, %v747
  %v751 = vxor.u32 %v750, 2147483648
  %v752 = vmul.f32 %v751, 1.442695
  %v753 = vpow.pop %v752
  %v754 = vadd.f32 %v753, 1.0
  %v755 = vrcp.pop %v754
  %v756 = vmul.f32 %v754, %v755
  %v757 = vsub.f32 1.0, %v756
  %v758 = vmul.f32 %v755, %v757
  %v759 = vadd.f32 %v755, %v758
  %vm760 = vweird.f32 %v754
  %vm761 = vweird.f32 %v755
  %vm762 = vmor %vm760, %vm761
  %v763 = vsel %vm762, %v755, %v759
  %v764 = vand.u32 2147483647, %v754
  %vm765 = vcmp.eq.f32.partialorder %v764, 8.507059e+37
  %v766 = vand.u32 %v754, 2147483648
  %v767 = vor.u32 1.1754944e-38, %v766
  %v768 = vsel %vm765, %v767, %v763
  %v769 = vmul.f32 1.0, %v768
  %v770 = vtanh.pop %v750
  %v771 = vld [vmem:[#allocation5] sm:$0x3]
  %773 = vrot.lane.b32.xlu0 %v771, 32
  %v774 = vpop.permute.xlu0 %773
  %v776 = vmul.f32 %v769, %v774
  %778 = vrot.lane.b32.xlu0 %v770, 64
  %v779 = vpop.permute.xlu0 %778
  %v781 = vmul.f32 %v769, %v779
  %783 = vrot.lane.b32.xlu0 %v781, 32
  %v784 = vpop.permute.xlu0 %783
  %v786 = vadd.f32 %v776, %v784
  %v787 = vtanh.pop %v786
  %789 = vrot.lane.b32.xlu0 %v787, 64
  %v790 = vpop.permute.xlu0 %789
  %v792 = vmul.f32 %v769, %v790
  %794 = vrot.lane.b32.xlu0 %v786, 96
  %v795 = vpop.permute.xlu0 %794
  %797 = vst.msk [vmem:[#allocation5] sm:$0x3] %vm67, %v795
  %799 = vrot.lane.b32.xlu0 %v792, 32
  %v800 = vpop.permute.xlu0 %799
  %802 = vst.msk [vmem:[#allocation4] sm:$0x3] %vm67, %v800
  %v803 = vld [vmem:[#allocation4] sm:$0x3]
  %v804 = vld [vmem:[#allocation2 + $0x2] sm:$0x3]
  %v805 = vpack.c.bf16 %v803, %v803
  %v807 = vsel %vm89, %v805, 0
  %809 = vmatpush.bf16.msra.mxu0 0
  %810 = vmatpush.bf16.msra.mxu0 0
  %811 = vmatpush.bf16.msra.mxu0 0
  %812 = vmatpush.bf16.msra.mxu0 0
  %813 = vmatpush.bf16.msra.mxu0 0
  %814 = vmatpush.bf16.msra.mxu0 0
  %815 = vmatpush.bf16.msra.mxu0 %v731
  %816 = vmatpush.bf16.msra.mxu0 %v730
  %817 = vmatmul.bf16.gmra.mxu0 %v807
  %v818 = vpop.f32.mrf.mxu0
  %v819 = vadd.f32 0.0, %v818
  %v820 = vpop.f32.mrf.mxu0
  %821 = vdwg.mxu0
  %v822 = vadd.f32 %v804, %v819
  %v823 = vxor.u32 %v822, 2147483648
  %v824 = vmul.f32 %v823, 1.442695
  %v825 = vpow.pop %v824
  %v826 = vadd.f32 %v825, 1.0
  %v827 = vrcp.pop %v826
  %v828 = vmul.f32 %v826, %v827
  %v829 = vsub.f32 1.0, %v828
  %v830 = vmul.f32 %v827, %v829
  %v831 = vadd.f32 %v827, %v830
  %vm832 = vweird.f32 %v826
  %vm833 = vweird.f32 %v827
  %vm834 = vmor %vm832, %vm833
  %v835 = vsel %vm834, %v827, %v831
  %v836 = vand.u32 2147483647, %v826
  %vm837 = vcmp.eq.f32.partialorder %v836, 8.507059e+37
  %v838 = vand.u32 %v826, 2147483648
  %v839 = vor.u32 1.1754944e-38, %v838
  %v840 = vsel %vm837, %v839, %v835
  %v841 = vmul.f32 1.0, %v840
  %v842 = vtanh.pop %v822
  %v843 = vld [vmem:[#allocation5] sm:$0x3]
  %845 = vrot.lane.b32.xlu0 %v843, 32
  %v846 = vpop.permute.xlu0 %845
  %v848 = vmul.f32 %v841, %v846
  %850 = vrot.lane.b32.xlu0 %v842, 64
  %v851 = vpop.permute.xlu0 %850
  %v853 = vmul.f32 %v841, %v851
  %855 = vrot.lane.b32.xlu0 %v853, 32
  %v856 = vpop.permute.xlu0 %855
  %v858 = vadd.f32 %v848, %v856
  %v859 = vtanh.pop %v858
  %861 = vrot.lane.b32.xlu0 %v859, 64
  %v862 = vpop.permute.xlu0 %861
  %v864 = vmul.f32 %v841, %v862
  %866 = vrot.lane.b32.xlu0 %v858, 96
  %v867 = vpop.permute.xlu0 %866
  %869 = vst.msk [vmem:[#allocation5] sm:$0x3] %vm67, %v867
  %871 = vrot.lane.b32.xlu0 %v864, 32
  %v872 = vpop.permute.xlu0 %871
  %874 = vst.msk [vmem:[#allocation4] sm:$0x3] %vm67, %v872
  %v875 = vld [vmem:[#allocation4] sm:$0x3]
  %v876 = vld [vmem:[#allocation2 + $0x4] sm:$0x3]
  %v877 = vpack.c.bf16 %v875, %v875
  %v879 = vsel %vm89, %v877, 0
  %881 = vmatpush.bf16.msra.mxu0 0
  %882 = vmatpush.bf16.msra.mxu0 0
  %883 = vmatpush.bf16.msra.mxu0 0
  %884 = vmatpush.bf16.msra.mxu0 0
  %885 = vmatpush.bf16.msra.mxu0 0
  %886 = vmatpush.bf16.msra.mxu0 0
  %887 = vmatpush.bf16.msra.mxu0 %v731
  %888 = vmatpush.bf16.msra.mxu0 %v730
  %889 = vmatmul.bf16.gmra.mxu0 %v879
  %v890 = vpop.f32.mrf.mxu0
  %v891 = vadd.f32 0.0, %v890
  %v892 = vpop.f32.mrf.mxu0
  %893 = vdwg.mxu0
  %v894 = vadd.f32 %v876, %v891
  %v895 = vxor.u32 %v894, 2147483648
  %v896 = vmul.f32 %v895, 1.442695
  %v897 = vpow.pop %v896
  %v898 = vadd.f32 %v897, 1.0
  %v899 = vrcp.pop %v898
  %v900 = vmul.f32 %v898, %v899
  %v901 = vsub.f32 1.0, %v900
  %v902 = vmul.f32 %v899, %v901
  %v903 = vadd.f32 %v899, %v902
  %vm904 = vweird.f32 %v898
  %vm905 = vweird.f32 %v899
  %vm906 = vmor %vm904, %vm905
  %v907 = vsel %vm906, %v899, %v903
  %v908 = vand.u32 2147483647, %v898
  %vm909 = vcmp.eq.f32.partialorder %v908, 8.507059e+37
  %v910 = vand.u32 %v898, 2147483648
  %v911 = vor.u32 1.1754944e-38, %v910
  %v912 = vsel %vm909, %v911, %v907
  %v913 = vmul.f32 1.0, %v912
  %v914 = vtanh.pop %v894
  %v915 = vld [vmem:[#allocation5] sm:$0x3]
  %917 = vrot.lane.b32.xlu0 %v915, 32
  %v918 = vpop.permute.xlu0 %917
  %v920 = vmul.f32 %v913, %v918
  %922 = vrot.lane.b32.xlu0 %v914, 64
  %v923 = vpop.permute.xlu0 %922
  %v925 = vmul.f32 %v913, %v923
  %927 = vrot.lane.b32.xlu0 %v925, 32
  %v928 = vpop.permute.xlu0 %927
  %v930 = vadd.f32 %v920, %v928
  %v931 = vtanh.pop %v930
  %933 = vrot.lane.b32.xlu0 %v931, 64
  %v934 = vpop.permute.xlu0 %933
  %v936 = vmul.f32 %v913, %v934
  %938 = vrot.lane.b32.xlu0 %v930, 96
  %v939 = vpop.permute.xlu0 %938
  %941 = vst.msk [vmem:[#allocation5] sm:$0x3] %vm67, %v939
  %943 = vrot.lane.b32.xlu0 %v936, 32
  %v944 = vpop.permute.xlu0 %943
  %946 = vst.msk [vmem:[#allocation4] sm:$0x3] %vm67, %v944
  %v947 = vld [vmem:[#allocation4] sm:$0x3]
  %v948 = vld [vmem:[#allocation2 + $0x6] sm:$0x3]
  %v949 = vpack.c.bf16 %v947, %v947
  %v951 = vsel %vm89, %v949, 0
  %953 = vmatpush.bf16.msra.mxu0 0
  %954 = vmatpush.bf16.msra.mxu0 0
  %955 = vmatpush.bf16.msra.mxu0 0
  %956 = vmatpush.bf16.msra.mxu0 0
  %957 = vmatpush.bf16.msra.mxu0 0
  %958 = vmatpush.bf16.msra.mxu0 0
  %959 = vmatpush.bf16.msra.mxu0 %v731
  %960 = vmatpush.bf16.msra.mxu0 %v730
  %961 = vmatmul.bf16.gmra.mxu0 %v951
  %v962 = vpop.f32.mrf.mxu0
  %v963 = vadd.f32 0.0, %v962
  %v964 = vpop.f32.mrf.mxu0
  %965 = vdwg.mxu0
  %v966 = vadd.f32 %v948, %v963
  %v967 = vxor.u32 %v966, 2147483648
  %v968 = vmul.f32 %v967, 1.442695
  %v969 = vpow.pop %v968
  %v970 = vadd.f32 %v969, 1.0
  %v971 = vrcp.pop %v970
  %v972 = vmul.f32 %v970, %v971
  %v973 = vsub.f32 1.0, %v972
  %v974 = vmul.f32 %v971, %v973
  %v975 = vadd.f32 %v971, %v974
  %vm976 = vweird.f32 %v970
  %vm977 = vweird.f32 %v971
  %vm978 = vmor %vm976, %vm977
  %v979 = vsel %vm978, %v971, %v975
  %v980 = vand.u32 2147483647, %v970
  %vm981 = vcmp.eq.f32.partialorder %v980, 8.507059e+37
  %v982 = vand.u32 %v970, 2147483648
  %v983 = vor.u32 1.1754944e-38, %v982
  %v984 = vsel %vm981, %v983, %v979
  %v985 = vmul.f32 1.0, %v984
  %v986 = vtanh.pop %v966
  %v987 = vld [vmem:[#allocation5] sm:$0x3]
  %989 = vrot.lane.b32.xlu0 %v987, 32
  %v990 = vpop.permute.xlu0 %989
  %v992 = vmul.f32 %v985, %v990
  %994 = vrot.lane.b32.xlu0 %v986, 64
  %v995 = vpop.permute.xlu0 %994
  %v997 = vmul.f32 %v985, %v995
  %999 = vrot.lane.b32.xlu0 %v997, 32
  %v1000 = vpop.permute.xlu0 %999
  %v1002 = vadd.f32 %v992, %v1000
  %v1003 = vtanh.pop %v1002
  %1005 = vrot.lane.b32.xlu0 %v1003, 64
  %v1006 = vpop.permute.xlu0 %1005
  %v1008 = vmul.f32 %v985, %v1006
  %1010 = vrot.lane.b32.xlu0 %v1002, 96
  %v1011 = vpop.permute.xlu0 %1010
  %1013 = vst.msk [vmem:[#allocation5] sm:$0x3] %vm67, %v1011
  %1015 = vrot.lane.b32.xlu0 %v1008, 32
  %v1016 = vpop.permute.xlu0 %1015
  %1018 = vst.msk [vmem:[#allocation4] sm:$0x3] %vm67, %v1016
  %v1019 = vld [vmem:[#allocation4] sm:$0x3]
  %v1020 = vld [vmem:[#allocation2 + $0x8] sm:$0x3]
  %v1021 = vpack.c.bf16 %v1019, %v1019
  %v1023 = vsel %vm89, %v1021, 0
  %1025 = vmatpush.bf16.msra.mxu0 0
  %1026 = vmatpush.bf16.msra.mxu0 0
  %1027 = vmatpush.bf16.msra.mxu0 0
  %1028 = vmatpush.bf16.msra.mxu0 0
  %1029 = vmatpush.bf16.msra.mxu0 0
  %1030 = vmatpush.bf16.msra.mxu0 0
  %1031 = vmatpush.bf16.msra.mxu0 %v731
  %1032 = vmatpush.bf16.msra.mxu0 %v730
  %1033 = vmatmul.bf16.gmra.mxu0 %v1023
  %v1034 = vpop.f32.mrf.mxu0
  %v1035 = vadd.f32 0.0, %v1034
  %v1036 = vpop.f32.mrf.mxu0
  %1037 = vdwg.mxu0
  %v1038 = vadd.f32 %v1020, %v1035
  %v1039 = vxor.u32 %v1038, 2147483648
  %v1040 = vmul.f32 %v1039, 1.442695
  %v1041 = vpow.pop %v1040
  %v1042 = vadd.f32 %v1041, 1.0
  %v1043 = vrcp.pop %v1042
  %v1044 = vmul.f32 %v1042, %v1043
  %v1045 = vsub.f32 1.0, %v1044
  %v1046 = vmul.f32 %v1043, %v1045
  %v1047 = vadd.f32 %v1043, %v1046
  %vm1048 = vweird.f32 %v1042
  %vm1049 = vweird.f32 %v1043
  %vm1050 = vmor %vm1048, %vm1049
  %v1051 = vsel %vm1050, %v1043, %v1047
  %v1052 = vand.u32 2147483647, %v1042
  %vm1053 = vcmp.eq.f32.partialorder %v1052, 8.507059e+37
  %v1054 = vand.u32 %v1042, 2147483648
  %v1055 = vor.u32 1.1754944e-38, %v1054
  %v1056 = vsel %vm1053, %v1055, %v1051
  %v1057 = vmul.f32 1.0, %v1056
  %v1058 = vtanh.pop %v1038
  %v1059 = vld [vmem:[#allocation5] sm:$0x3]
  %1061 = vrot.lane.b32.xlu0 %v1059, 32
  %v1062 = vpop.permute.xlu0 %1061
  %v1064 = vmul.f32 %v1057, %v1062
  %1066 = vrot.lane.b32.xlu0 %v1058, 64
  %v1067 = vpop.permute.xlu0 %1066
  %v1069 = vmul.f32 %v1057, %v1067
  %1071 = vrot.lane.b32.xlu0 %v1069, 32
  %v1072 = vpop.permute.xlu0 %1071
  %v1074 = vadd.f32 %v1064, %v1072
  %v1075 = vtanh.pop %v1074
  %1077 = vrot.lane.b32.xlu0 %v1075, 64
  %v1078 = vpop.permute.xlu0 %1077
  %v1080 = vmul.f32 %v1057, %v1078
  %1082 = vrot.lane.b32.xlu0 %v1074, 96
  %v1083 = vpop.permute.xlu0 %1082
  %1085 = vst.msk [vmem:[#allocation5] sm:$0x3] %vm67, %v1083
  %1087 = vrot.lane.b32.xlu0 %v1080, 32
  %v1088 = vpop.permute.xlu0 %1087
  %1090 = vst.msk [vmem:[#allocation4] sm:$0x3] %vm67, %v1088
  %v1091 = vld [vmem:[#allocation4] sm:$0x3]
  %v1092 = vld [vmem:[#allocation2 + $0xa] sm:$0x3]
  %v1093 = vpack.c.bf16 %v1091, %v1091
  %v1095 = vsel %vm89, %v1093, 0
  %1097 = vmatpush.bf16.msra.mxu0 0
  %1098 = vmatpush.bf16.msra.mxu0 0
  %1099 = vmatpush.bf16.msra.mxu0 0
  %1100 = vmatpush.bf16.msra.mxu0 0
  %1101 = vmatpush.bf16.msra.mxu0 0
  %1102 = vmatpush.bf16.msra.mxu0 0
  %1103 = vmatpush.bf16.msra.mxu0 %v731
  %1104 = vmatpush.bf16.msra.mxu0 %v730
  %1105 = vmatmul.bf16.gmra.mxu0 %v1095
  %v1106 = vpop.f32.mrf.mxu0
  %v1107 = vadd.f32 0.0, %v1106
  %v1108 = vpop.f32.mrf.mxu0
  %1109 = vdwg.mxu0
  %v1110 = vadd.f32 %v1092, %v1107
  %v1111 = vxor.u32 %v1110, 2147483648
  %v1112 = vmul.f32 %v1111, 1.442695
  %v1113 = vpow.pop %v1112
  %v1114 = vadd.f32 %v1113, 1.0
  %v1115 = vrcp.pop %v1114
  %v1116 = vmul.f32 %v1114, %v1115
  %v1117 = vsub.f32 1.0, %v1116
  %v1118 = vmul.f32 %v1115, %v1117
  %v1119 = vadd.f32 %v1115, %v1118
  %vm1120 = vweird.f32 %v1114
  %vm1121 = vweird.f32 %v1115
  %vm1122 = vmor %vm1120, %vm1121
  %v1123 = vsel %vm1122, %v1115, %v1119
  %v1124 = vand.u32 2147483647, %v1114
  %vm1125 = vcmp.eq.f32.partialorder %v1124, 8.507059e+37
  %v1126 = vand.u32 %v1114, 2147483648
  %v1127 = vor.u32 1.1754944e-38, %v1126
  %v1128 = vsel %vm1125, %v1127, %v1123
  %v1129 = vmul.f32 1.0, %v1128
  %v1130 = vtanh.pop %v1110
  %v1131 = vld [vmem:[#allocation5] sm:$0x3]
  %1133 = vrot.lane.b32.xlu0 %v1131, 32
  %v1134 = vpop.permute.xlu0 %1133
  %v1136 = vmul.f32 %v1129, %v1134
  %1138 = vrot.lane.b32.xlu0 %v1130, 64
  %v1139 = vpop.permute.xlu0 %1138
  %v1141 = vmul.f32 %v1129, %v1139
  %1143 = vrot.lane.b32.xlu0 %v1141, 32
  %v1144 = vpop.permute.xlu0 %1143
  %v1146 = vadd.f32 %v1136, %v1144
  %v1147 = vtanh.pop %v1146
  %1149 = vrot.lane.b32.xlu0 %v1147, 64
  %v1150 = vpop.permute.xlu0 %1149
  %v1152 = vmul.f32 %v1129, %v1150
  %1154 = vrot.lane.b32.xlu0 %v1146, 96
  %v1155 = vpop.permute.xlu0 %1154
  %1157 = vst.msk [vmem:[#allocation5] sm:$0x3] %vm67, %v1155
  %1159 = vrot.lane.b32.xlu0 %v1152, 32
  %v1160 = vpop.permute.xlu0 %1159
  %1162 = vst.msk [vmem:[#allocation4] sm:$0x3] %vm67, %v1160
  %v1163 = vld [vmem:[#allocation4] sm:$0x3]
  %v1164 = vld [vmem:[#allocation2 + $0xc] sm:$0x3]
  %v1165 = vpack.c.bf16 %v1163, %v1163
  %v1167 = vsel %vm89, %v1165, 0
  %1169 = vmatpush.bf16.msra.mxu0 0
  %1170 = vmatpush.bf16.msra.mxu0 0
  %1171 = vmatpush.bf16.msra.mxu0 0
  %1172 = vmatpush.bf16.msra.mxu0 0
  %1173 = vmatpush.bf16.msra.mxu0 0
  %1174 = vmatpush.bf16.msra.mxu0 0
  %1175 = vmatpush.bf16.msra.mxu0 %v731
  %1176 = vmatpush.bf16.msra.mxu0 %v730
  %1177 = vmatmul.bf16.gmra.mxu0 %v1167
  %v1178 = vpop.f32.mrf.mxu0
  %v1179 = vadd.f32 0.0, %v1178
  %v1180 = vpop.f32.mrf.mxu0
  %1181 = vdwg.mxu0
  %v1182 = vadd.f32 %v1164, %v1179
  %v1183 = vxor.u32 %v1182, 2147483648
  %v1184 = vmul.f32 %v1183, 1.442695
  %v1185 = vpow.pop %v1184
  %v1186 = vadd.f32 %v1185, 1.0
  %v1187 = vrcp.pop %v1186
  %v1188 = vmul.f32 %v1186, %v1187
  %v1189 = vsub.f32 1.0, %v1188
  %v1190 = vmul.f32 %v1187, %v1189
  %v1191 = vadd.f32 %v1187, %v1190
  %vm1192 = vweird.f32 %v1186
  %vm1193 = vweird.f32 %v1187
  %vm1194 = vmor %vm1192, %vm1193
  %v1195 = vsel %vm1194, %v1187, %v1191
  %v1196 = vand.u32 2147483647, %v1186
  %vm1197 = vcmp.eq.f32.partialorder %v1196, 8.507059e+37
  %v1198 = vand.u32 %v1186, 2147483648
  %v1199 = vor.u32 1.1754944e-38, %v1198
  %v1200 = vsel %vm1197, %v1199, %v1195
  %v1201 = vmul.f32 1.0, %v1200
  %v1202 = vtanh.pop %v1182
  %v1203 = vld [vmem:[#allocation5] sm:$0x3]
  %1205 = vrot.lane.b32.xlu0 %v1203, 32
  %v1206 = vpop.permute.xlu0 %1205
  %v1208 = vmul.f32 %v1201, %v1206
  %1210 = vrot.lane.b32.xlu0 %v1202, 64
  %v1211 = vpop.permute.xlu0 %1210
  %v1213 = vmul.f32 %v1201, %v1211
  %1215 = vrot.lane.b32.xlu0 %v1213, 32
  %v1216 = vpop.permute.xlu0 %1215
  %v1218 = vadd.f32 %v1208, %v1216
  %v1219 = vtanh.pop %v1218
  %1221 = vrot.lane.b32.xlu0 %v1219, 64
  %v1222 = vpop.permute.xlu0 %1221
  %v1224 = vmul.f32 %v1201, %v1222
  %1226 = vrot.lane.b32.xlu0 %v1218, 96
  %v1227 = vpop.permute.xlu0 %1226
  %1229 = vst.msk [vmem:[#allocation5] sm:$0x3] %vm67, %v1227
  %1231 = vrot.lane.b32.xlu0 %v1224, 32
  %v1232 = vpop.permute.xlu0 %1231
  %1234 = vst.msk [vmem:[#allocation4] sm:$0x3] %vm67, %v1232
  %v1235 = vld [vmem:[#allocation4] sm:$0x3]
  %v1236 = vld [vmem:[#allocation2 + $0xe] sm:$0x3]
  %v1237 = vpack.c.bf16 %v1235, %v1235
  %v1239 = vsel %vm89, %v1237, 0
  %1241 = vmatpush.bf16.msra.mxu0 0
  %1242 = vmatpush.bf16.msra.mxu0 0
  %1243 = vmatpush.bf16.msra.mxu0 0
  %1244 = vmatpush.bf16.msra.mxu0 0
  %1245 = vmatpush.bf16.msra.mxu0 0
  %1246 = vmatpush.bf16.msra.mxu0 0
  %1247 = vmatpush.bf16.msra.mxu0 %v731
  %1248 = vmatpush.bf16.msra.mxu0 %v730
  %1249 = vmatmul.bf16.gmra.mxu0 %v1239
  %v1250 = vpop.f32.mrf.mxu0
  %v1251 = vadd.f32 0.0, %v1250
  %v1252 = vpop.f32.mrf.mxu0
  %1253 = vdwg.mxu0
  %v1254 = vadd.f32 %v1236, %v1251
  %v1255 = vxor.u32 %v1254, 2147483648
  %v1256 = vmul.f32 %v1255, 1.442695
  %v1257 = vpow.pop %v1256
  %v1258 = vadd.f32 %v1257, 1.0
  %v1259 = vrcp.pop %v1258
  %v1260 = vmul.f32 %v1258, %v1259
  %v1261 = vsub.f32 1.0, %v1260
  %v1262 = vmul.f32 %v1259, %v1261
  %v1263 = vadd.f32 %v1259, %v1262
  %vm1264 = vweird.f32 %v1258
  %vm1265 = vweird.f32 %v1259
  %vm1266 = vmor %vm1264, %vm1265
  %v1267 = vsel %vm1266, %v1259, %v1263
  %v1268 = vand.u32 2147483647, %v1258
  %vm1269 = vcmp.eq.f32.partialorder %v1268, 8.507059e+37
  %v1270 = vand.u32 %v1258, 2147483648
  %v1271 = vor.u32 1.1754944e-38, %v1270
  %v1272 = vsel %vm1269, %v1271, %v1267
  %v1273 = vmul.f32 1.0, %v1272
  %v1274 = vtanh.pop %v1254
  %v1275 = vld [vmem:[#allocation5] sm:$0x3]
  %1277 = vrot.lane.b32.xlu0 %v1275, 32
  %v1278 = vpop.permute.xlu0 %1277
  %v1280 = vmul.f32 %v1273, %v1278
  %1282 = vrot.lane.b32.xlu0 %v1274, 64
  %v1283 = vpop.permute.xlu0 %1282
  %v1285 = vmul.f32 %v1273, %v1283
  %1287 = vrot.lane.b32.xlu0 %v1285, 32
  %v1288 = vpop.permute.xlu0 %1287
  %v1290 = vadd.f32 %v1280, %v1288
  %v1291 = vtanh.pop %v1290
  %1293 = vrot.lane.b32.xlu0 %v1291, 64
  %v1294 = vpop.permute.xlu0 %1293
  %v1296 = vmul.f32 %v1273, %v1294
  %1298 = vrot.lane.b32.xlu0 %v1290, 96
  %v1299 = vpop.permute.xlu0 %1298
  %1301 = vst.msk [vmem:[#allocation5] sm:$0x3] %vm67, %v1299
  %1303 = vrot.lane.b32.xlu0 %v1296, 32
  %v1304 = vpop.permute.xlu0 %1303
  %1306 = vst.msk [vmem:[#allocation4] sm:$0x3] %vm67, %v1304
  %v1307 = vld [vmem:[#allocation4] sm:$0x3]
  %v1308 = vld [vmem:[%s7] sm:$0x1]
  %v1310 = vperm.slane %v1308, 0
  %v1312 = vmul.f32 %v1307, %v1310
  %v1313 = vsel %vm67, %v1312, 0.0
  %1314 = vadd.xlane.f32.xlu0 %v1313
  %v1315 = vpop.xlane.xlu0 %1314
  %v1316 = vld [vmem:[#allocation6] sm:$0x1]
  %v1318 = vperm.slane %v1316, 0
  %v1320 = vadd.f32 %v1315, %v1318
  %vm1321 = vcmask 1024
  %1322 = vst.msk [vmem:[%s9] sm:$0x3] %vm1321, %v1320
  // Predicated region
  $region38: #{lstm_forward.1} parent=0 // pred_check
    _
  $region39: #{lstm_forward.1} parent=0 // pred_check_branch
    %1324 = sbr.rel (0) target = $region41
  $region40: #{lstm_forward.1} parent=0 // pred_region
    _
  $region41: #{lstm_forward.1} parent=0 // pred_fallthru
    _
  // Predicated region
  $region42: #{lstm_forward.1} parent=0 // pred_check
    _
  $region43: #{lstm_forward.1} parent=0 // pred_check_branch
    %1326 = sbr.rel (0) target = $region45
  $region44: #{lstm_forward.1} parent=0 // pred_region
    _
  $region45: #{lstm_forward.1} parent=0 // pred_fallthru
    _

</llo_original>
